<compile_context>
chip_gen: v6e
topology: v6e:2x2x1
jax: 0.10.0
libtpu: 0.0.40
codegen_flags: <defaults>
</compile_context>

<pallas_src>
import jax
import jax.numpy as jnp
from jax.experimental import pallas as pl
from jax.experimental.pallas import tpu as pltpu


def _round_up(v, m):
    return -(-v // m) * m


def _mlp_kernel(x_ref,
                w1_ref, b1_ref,
                w2_ref, b2_ref,
                w3_ref, b3_ref,
                w4_ref, b4_ref,
                w5_ref, b5_ref,
                o_ref):
    """One batch-tile of the full 5-layer MLP + softmax.  Weights are bf16,
    all accumulation / elementwise math is f32.  The last layer's output is
    lane-padded to a multiple of 128; padded logits arrive at -1e30 via the
    padded bias, so exp() drives them to exactly 0 and softmax is unaffected."""
    h = x_ref[...]  # [tile_b, n_obs] f32

    def dense(h, w_ref, b_ref, relu):
        # Cast activations to the weight dtype (bf16) for the MXU; accumulate f32.
        y = jnp.dot(h.astype(w_ref.dtype), w_ref[...],
                    preferred_element_type=jnp.float32) + b_ref[...]
        return jnp.maximum(y, 0.0) if relu else y

    h = dense(h, w1_ref, b1_ref, relu=True)        # n_obs -> 128
    h = dense(h, w2_ref, b2_ref, relu=True)        # 128   -> 512
    h = dense(h, w3_ref, b3_ref, relu=True)        # 512   -> 512
    h = dense(h, w4_ref, b4_ref, relu=True)        # 512   -> 128
    logits = dense(h, w5_ref, b5_ref, relu=False)  # 128   -> n_act_pad (>=128)

    # Numerically-stable softmax over the (padded) action dim, f32.
    m = jnp.max(logits, axis=-1, keepdims=True)
    e = jnp.exp(logits - m)                        # padded columns -> exactly 0
    o_ref[...] = e / jnp.sum(e, axis=-1, keepdims=True)


def dqn_network_forward(x, params, *, tile_b=None):
    """x: [B, n_obs] float32.  params: list of (W[in,out], b[1,out]) matching
    the PyTorch Network layer shapes (weights may be bf16, biases f32)."""
    x = x.astype(jnp.float32)
    B, n_obs = x.shape
    n_actions = params[-1][0].shape[1]

    # --- Lane-dense output: pad the last layer to a multiple of 128 columns.
    n_act_pad = _round_up(max(n_actions, 128), 128)
    w5, b5 = params[-1]
    pad_cols = n_act_pad - n_actions
    if pad_cols:
        w5 = jnp.pad(w5, ((0, 0), (0, pad_cols)))                        # zero weights
        b5 = jnp.pad(b5.astype(jnp.float32), ((0, 0), (0, pad_cols)),
                     constant_values=-1e30)                              # softmax(pad) == 0
    padded_params = list(params[:-1]) + [(w5, b5)]

    # --- Batch tiling: >= 2 grid steps for moderate B (v7x has 2 TCs), and
    # tile_b=512 for big batches to amortize per-step pipeline overhead.
    if tile_b is None:
        if B <= 8:
            tile_b = 8
        elif B <= 1024:
            tile_b = _round_up(_round_up(B, 2) // 2, 8)   # -> exactly 2 grid steps
        else:
            tile_b = 512
    padded_B = _round_up(B, tile_b)
    if padded_B != B:
        x = jnp.pad(x, ((0, padded_B - B), (0, 0)))
    grid = (padded_B // tile_b,)

    flat_params = []
    in_specs = [pl.BlockSpec((tile_b, n_obs), lambda i: (i, 0))]
    for w, b in padded_params:
        flat_params.append(w)
        flat_params.append(b)
        # Constant block index -> each weight/bias is fetched once and stays
        # VMEM-resident across all batch-grid steps (no per-step weight DMA).
        in_specs.append(pl.BlockSpec(w.shape, lambda i: (0, 0)))
        in_specs.append(pl.BlockSpec(b.shape, lambda i: (0, 0)))

    out_specs = pl.BlockSpec((tile_b, n_act_pad), lambda i: (i, 0))

    # Explicit VMEM budget (v5e default scoped limit is only 16 MiB):
    # double-buffered weights + double-buffered in/out tiles + working set.
    weight_bytes = sum(int(a.size) * a.dtype.itemsize for a in flat_params)
    io_bytes = 2 * tile_b * (n_obs + n_act_pad) * 4
    work_bytes = 8 * tile_b * 512 * 4
    vmem_limit = int(min(64 << 20,
                         max(32 << 20,
                             2 * weight_bytes + io_bytes + work_bytes + (4 << 20))))

    # Advisory cost estimate so XLA schedules the surrounding graph around us.
    dims = [n_obs, 128, 512, 512, 128, n_act_pad]
    flops = 2 * padded_B * sum(a * b for a, b in zip(dims[:-1], dims[1:]))
    bytes_accessed = int(x.size * x.dtype.itemsize + weight_bytes
                         + padded_B * n_act_pad * 4)
    cost = pl.CostEstimate(flops=flops,
                           transcendentals=padded_B * n_act_pad,
                           bytes_accessed=bytes_accessed)

    # TODO(synk): for the per-env-step DQN case (B~1-8, one call per step) the
    # dominant cost is reloading ~0.8 MB of weights from HBM every call; hiding
    # that needs a cross-pallas_call weight prefetch (or batching several states
    # per call) at the call site -- not expressible inside this single kernel.
    out = pl.pallas_call(
        _mlp_kernel,
        out_shape=jax.ShapeDtypeStruct((padded_B, n_act_pad), jnp.float32),
        grid=grid,
        in_specs=in_specs,
        out_specs=out_specs,
        compiler_params=pltpu.CompilerParams(
            dimension_semantics=("parallel",),
            vmem_limit_bytes=vmem_limit),
        cost_estimate=cost,
    )(x, *flat_params)

    return out[:B, :n_actions]


def init_params(key, n_observations, n_actions, weight_dtype=jnp.bfloat16):
    """Deterministic synthetic init (PyTorch-Linear-like uniform fan-in scaling).
    Weights stored in bf16 (matmul operands), biases in f32."""
    sizes = [(n_observations, 128), (128, 512), (512, 512), (512, 128),
             (128, n_actions)]
    params = []
    for fan_in, fan_out in sizes:
        kw, kb, key = jax.random.split(key, 3)
        bound = 1.0 / (fan_in ** 0.5)
        w = jax.random.uniform(kw, (fan_in, fan_out), jnp.float32,
                               -bound, bound).astype(weight_dtype)
        b = jax.random.uniform(kb, (1, fan_out), jnp.float32, -bound, bound)
        params.append((w, b))
    return params


def reference_forward(x, params):
    """Pure-JAX reference with the same precision recipe as the kernel."""
    h = x.astype(jnp.float32)
    for i, (w, b) in enumerate(params):
        h = jnp.dot(h.astype(w.dtype), w,
                    preferred_element_type=jnp.float32) + b
        if i < len(params) - 1:
            h = jnp.maximum(h, 0.0)
    return jax.nn.softmax(h, axis=-1)


if __name__ == "__main__":
    key = jax.random.PRNGKey(0)
    n_observations = 16
    n_actions = 8
    batch = 8

    kx, kp = jax.random.split(key)
    x = jax.random.normal(kx, (batch, n_observations), jnp.float32)
    params = init_params(kp, n_observations, n_actions)

    out = jax.block_until_ready(dqn_network_forward(x, params))
    ref = reference_forward(x, params)

    assert out.shape == (batch, n_actions)
    assert jnp.allclose(out, ref, atol=1e-3, rtol=1e-3), "mismatch vs reference"
    assert jnp.allclose(jnp.sum(out, axis=-1), 1.0, atol=1e-5), \
        "softmax rows must sum to 1"

    print("KERNEL_OK")
</pallas_src>

<mosaic_0001>
module attributes {stable_mosaic.version = 11 : i64} {
  func.func @_mlp_kernel(%arg0: i32, %arg1: memref<8x16xf32, #tpu.memory_space<vmem>>, %arg2: memref<16x128xbf16, #tpu.memory_space<vmem>>, %arg3: memref<1x128xf32, #tpu.memory_space<vmem>>, %arg4: memref<128x512xbf16, #tpu.memory_space<vmem>>, %arg5: memref<1x512xf32, #tpu.memory_space<vmem>>, %arg6: memref<512x512xbf16, #tpu.memory_space<vmem>>, %arg7: memref<1x512xf32, #tpu.memory_space<vmem>>, %arg8: memref<512x128xbf16, #tpu.memory_space<vmem>>, %arg9: memref<1x128xf32, #tpu.memory_space<vmem>>, %arg10: memref<128x128xbf16, #tpu.memory_space<vmem>>, %arg11: memref<1x128xf32, #tpu.memory_space<vmem>>, %arg12: memref<8x128xf32, #tpu.memory_space<vmem>>) attributes {dimension_semantics = [#tpu.dimension_semantics<parallel>], iteration_bounds = array<i64: 1>, scalar_prefetch = 0 : i64, scratch_operands = 0 : i64, tpu.core_type = #tpu.core_type<tc>, window_params = [{transform_indices = @transform_0, window_bounds = array<i64: 8, 16>}, {pipeline_mode = #tpu.pipeline_mode<synchronous>, transform_indices = @transform_1, window_bounds = array<i64: 16, 128>}, {pipeline_mode = #tpu.pipeline_mode<synchronous>, transform_indices = @transform_2, window_bounds = array<i64: 1, 128>}, {pipeline_mode = #tpu.pipeline_mode<synchronous>, transform_indices = @transform_3, window_bounds = array<i64: 128, 512>}, {pipeline_mode = #tpu.pipeline_mode<synchronous>, transform_indices = @transform_4, window_bounds = array<i64: 1, 512>}, {pipeline_mode = #tpu.pipeline_mode<synchronous>, transform_indices = @transform_5, window_bounds = array<i64: 512, 512>}, {pipeline_mode = #tpu.pipeline_mode<synchronous>, transform_indices = @transform_6, window_bounds = array<i64: 1, 512>}, {pipeline_mode = #tpu.pipeline_mode<synchronous>, transform_indices = @transform_7, window_bounds = array<i64: 512, 128>}, {pipeline_mode = #tpu.pipeline_mode<synchronous>, transform_indices = @transform_8, window_bounds = array<i64: 1, 128>}, {pipeline_mode = #tpu.pipeline_mode<synchronous>, transform_indices = @transform_9, window_bounds = array<i64: 128, 128>}, {pipeline_mode = #tpu.pipeline_mode<synchronous>, transform_indices = @transform_10, window_bounds = array<i64: 1, 128>}, {transform_indices = @transform_11, window_bounds = array<i64: 8, 128>}]} {
    %c0 = arith.constant 0 : index
    %c0_0 = arith.constant 0 : index
    %0 = vector.load %arg1[%c0, %c0_0] : memref<8x16xf32, #tpu.memory_space<vmem>>, vector<8x16xf32>
    %1 = arith.truncf %0 : vector<8x16xf32> to vector<8x16xbf16>
    %c0_1 = arith.constant 0 : index
    %c0_2 = arith.constant 0 : index
    %2 = vector.load %arg2[%c0_1, %c0_2] : memref<16x128xbf16, #tpu.memory_space<vmem>>, vector<16x128xbf16>
    %cst = arith.constant dense<0.000000e+00> : vector<8x128xf32>
    %3 = tpu.matmul %1, %2, %cst {dimension_numbers = #tpu.dot_dimension_numbers<[1], [0], [0], [1], [0, 0, 1, 1], [], []>} : vector<8x16xbf16>, vector<16x128xbf16>, vector<8x128xf32> -> vector<8x128xf32>
    %c0_3 = arith.constant 0 : index
    %c0_4 = arith.constant 0 : index
    %4 = vector.load %arg3[%c0_3, %c0_4] : memref<1x128xf32, #tpu.memory_space<vmem>>, vector<1x128xf32>
    %5 = vector.broadcast %4 : vector<1x128xf32> to vector<8x128xf32>
    %6 = arith.addf %3, %5 : vector<8x128xf32>
    %cst_5 = arith.constant 0.000000e+00 : f32
    %7 = vector.broadcast %cst_5 : f32 to vector<8x128xf32>
    %8 = arith.maximumf %6, %7 : vector<8x128xf32>
    %9 = arith.truncf %8 : vector<8x128xf32> to vector<8x128xbf16>
    %c0_6 = arith.constant 0 : index
    %c0_7 = arith.constant 0 : index
    %10 = vector.load %arg4[%c0_6, %c0_7] : memref<128x512xbf16, #tpu.memory_space<vmem>>, vector<128x512xbf16>
    %cst_8 = arith.constant dense<0.000000e+00> : vector<8x512xf32>
    %11 = tpu.matmul %9, %10, %cst_8 {dimension_numbers = #tpu.dot_dimension_numbers<[1], [0], [0], [1], [0, 0, 1, 1], [], []>} : vector<8x128xbf16>, vector<128x512xbf16>, vector<8x512xf32> -> vector<8x512xf32>
    %c0_9 = arith.constant 0 : index
    %c0_10 = arith.constant 0 : index
    %12 = vector.load %arg5[%c0_9, %c0_10] : memref<1x512xf32, #tpu.memory_space<vmem>>, vector<1x512xf32>
    %13 = vector.broadcast %12 : vector<1x512xf32> to vector<8x512xf32>
    %14 = arith.addf %11, %13 : vector<8x512xf32>
    %cst_11 = arith.constant 0.000000e+00 : f32
    %15 = vector.broadcast %cst_11 : f32 to vector<8x512xf32>
    %16 = arith.maximumf %14, %15 : vector<8x512xf32>
    %17 = arith.truncf %16 : vector<8x512xf32> to vector<8x512xbf16>
    %c0_12 = arith.constant 0 : index
    %c0_13 = arith.constant 0 : index
    %18 = vector.load %arg6[%c0_12, %c0_13] : memref<512x512xbf16, #tpu.memory_space<vmem>>, vector<512x512xbf16>
    %cst_14 = arith.constant dense<0.000000e+00> : vector<8x512xf32>
    %19 = tpu.matmul %17, %18, %cst_14 {dimension_numbers = #tpu.dot_dimension_numbers<[1], [0], [0], [1], [0, 0, 1, 1], [], []>} : vector<8x512xbf16>, vector<512x512xbf16>, vector<8x512xf32> -> vector<8x512xf32>
    %c0_15 = arith.constant 0 : index
    %c0_16 = arith.constant 0 : index
    %20 = vector.load %arg7[%c0_15, %c0_16] : memref<1x512xf32, #tpu.memory_space<vmem>>, vector<1x512xf32>
    %21 = vector.broadcast %20 : vector<1x512xf32> to vector<8x512xf32>
    %22 = arith.addf %19, %21 : vector<8x512xf32>
    %cst_17 = arith.constant 0.000000e+00 : f32
    %23 = vector.broadcast %cst_17 : f32 to vector<8x512xf32>
    %24 = arith.maximumf %22, %23 : vector<8x512xf32>
    %25 = arith.truncf %24 : vector<8x512xf32> to vector<8x512xbf16>
    %c0_18 = arith.constant 0 : index
    %c0_19 = arith.constant 0 : index
    %26 = vector.load %arg8[%c0_18, %c0_19] : memref<512x128xbf16, #tpu.memory_space<vmem>>, vector<512x128xbf16>
    %cst_20 = arith.constant dense<0.000000e+00> : vector<8x128xf32>
    %27 = tpu.matmul %25, %26, %cst_20 {dimension_numbers = #tpu.dot_dimension_numbers<[1], [0], [0], [1], [0, 0, 1, 1], [], []>} : vector<8x512xbf16>, vector<512x128xbf16>, vector<8x128xf32> -> vector<8x128xf32>
    %c0_21 = arith.constant 0 : index
    %c0_22 = arith.constant 0 : index
    %28 = vector.load %arg9[%c0_21, %c0_22] : memref<1x128xf32, #tpu.memory_space<vmem>>, vector<1x128xf32>
    %29 = vector.broadcast %28 : vector<1x128xf32> to vector<8x128xf32>
    %30 = arith.addf %27, %29 : vector<8x128xf32>
    %cst_23 = arith.constant 0.000000e+00 : f32
    %31 = vector.broadcast %cst_23 : f32 to vector<8x128xf32>
    %32 = arith.maximumf %30, %31 : vector<8x128xf32>
    %33 = arith.truncf %32 : vector<8x128xf32> to vector<8x128xbf16>
    %c0_24 = arith.constant 0 : index
    %c0_25 = arith.constant 0 : index
    %34 = vector.load %arg10[%c0_24, %c0_25] : memref<128x128xbf16, #tpu.memory_space<vmem>>, vector<128x128xbf16>
    %cst_26 = arith.constant dense<0.000000e+00> : vector<8x128xf32>
    %35 = tpu.matmul %33, %34, %cst_26 {dimension_numbers = #tpu.dot_dimension_numbers<[1], [0], [0], [1], [0, 0, 1, 1], [], []>} : vector<8x128xbf16>, vector<128x128xbf16>, vector<8x128xf32> -> vector<8x128xf32>
    %c0_27 = arith.constant 0 : index
    %c0_28 = arith.constant 0 : index
    %36 = vector.load %arg11[%c0_27, %c0_28] : memref<1x128xf32, #tpu.memory_space<vmem>>, vector<1x128xf32>
    %37 = vector.broadcast %36 : vector<1x128xf32> to vector<8x128xf32>
    %38 = arith.addf %35, %37 : vector<8x128xf32>
    %cst_29 = arith.constant dense<0xFF800000> : vector<8xf32>
    %39 = vector.multi_reduction <maximumf>, %38, %cst_29 [1] : vector<8x128xf32> to vector<8xf32>
    %40 = vector.shape_cast %39 : vector<8xf32> to vector<8x1xf32>
    %41 = vector.broadcast %40 : vector<8x1xf32> to vector<8x128xf32>
    %42 = arith.subf %38, %41 : vector<8x128xf32>
    %43 = math.exp %42 : vector<8x128xf32>
    %cst_30 = arith.constant dense<0.000000e+00> : vector<8xf32>
    %44 = vector.multi_reduction <add>, %43, %cst_30 [1] : vector<8x128xf32> to vector<8xf32>
    %45 = vector.shape_cast %44 : vector<8xf32> to vector<8x1xf32>
    %46 = vector.broadcast %45 : vector<8x1xf32> to vector<8x128xf32>
    %47 = arith.divf %43, %46 : vector<8x128xf32>
    %c0_31 = arith.constant 0 : index
    %c0_32 = arith.constant 0 : index
    %48 = vector.load %arg12[%c0_31, %c0_32] : memref<8x128xf32, #tpu.memory_space<vmem>>, vector<8x128xf32>
    tpu.vector_store %arg12[%c0_31, %c0_32], %47 {strides = array<i32>} : memref<8x128xf32, #tpu.memory_space<vmem>>, vector<8x128xf32>,
    return
  }
  func.func @transform_0(%arg0: i32) -> (i32, i32) {
    %c0_i32 = arith.constant 0 : i32
    %c0_i32_0 = arith.constant 0 : i32
    return %arg0, %c0_i32 : i32, i32
  }
  func.func @transform_1(%arg0: i32) -> (i32, i32) {
    %c0_i32 = arith.constant 0 : i32
    %c0_i32_0 = arith.constant 0 : i32
    %c0_i32_1 = arith.constant 0 : i32
    return %c0_i32, %c0_i32_0 : i32, i32
  }
  func.func @transform_2(%arg0: i32) -> (i32, i32) {
    %c0_i32 = arith.constant 0 : i32
    %c0_i32_0 = arith.constant 0 : i32
    %c0_i32_1 = arith.constant 0 : i32
    return %c0_i32, %c0_i32_0 : i32, i32
  }
  func.func @transform_3(%arg0: i32) -> (i32, i32) {
    %c0_i32 = arith.constant 0 : i32
    %c0_i32_0 = arith.constant 0 : i32
    %c0_i32_1 = arith.constant 0 : i32
    return %c0_i32, %c0_i32_0 : i32, i32
  }
  func.func @transform_4(%arg0: i32) -> (i32, i32) {
    %c0_i32 = arith.constant 0 : i32
    %c0_i32_0 = arith.constant 0 : i32
    %c0_i32_1 = arith.constant 0 : i32
    return %c0_i32, %c0_i32_0 : i32, i32
  }
  func.func @transform_5(%arg0: i32) -> (i32, i32) {
    %c0_i32 = arith.constant 0 : i32
    %c0_i32_0 = arith.constant 0 : i32
    %c0_i32_1 = arith.constant 0 : i32
    return %c0_i32, %c0_i32_0 : i32, i32
  }
  func.func @transform_6(%arg0: i32) -> (i32, i32) {
    %c0_i32 = arith.constant 0 : i32
    %c0_i32_0 = arith.constant 0 : i32
    %c0_i32_1 = arith.constant 0 : i32
    return %c0_i32, %c0_i32_0 : i32, i32
  }
  func.func @transform_7(%arg0: i32) -> (i32, i32) {
    %c0_i32 = arith.constant 0 : i32
    %c0_i32_0 = arith.constant 0 : i32
    %c0_i32_1 = arith.constant 0 : i32
    return %c0_i32, %c0_i32_0 : i32, i32
  }
  func.func @transform_8(%arg0: i32) -> (i32, i32) {
    %c0_i32 = arith.constant 0 : i32
    %c0_i32_0 = arith.constant 0 : i32
    %c0_i32_1 = arith.constant 0 : i32
    return %c0_i32, %c0_i32_0 : i32, i32
  }
  func.func @transform_9(%arg0: i32) -> (i32, i32) {
    %c0_i32 = arith.constant 0 : i32
    %c0_i32_0 = arith.constant 0 : i32
    %c0_i32_1 = arith.constant 0 : i32
    return %c0_i32, %c0_i32_0 : i32, i32
  }
  func.func @transform_10(%arg0: i32) -> (i32, i32) {
    %c0_i32 = arith.constant 0 : i32
    %c0_i32_0 = arith.constant 0 : i32
    %c0_i32_1 = arith.constant 0 : i32
    return %c0_i32, %c0_i32_0 : i32, i32
  }
  func.func @transform_11(%arg0: i32) -> (i32, i32) {
    %c0_i32 = arith.constant 0 : i32
    %c0_i32_0 = arith.constant 0 : i32
    return %arg0, %c0_i32 : i32, i32
  }
}

</mosaic_0001>

<llo_original>
// kernel: tpu_custom_call.1
$region0: #{tpu_custom_call.1}
  #allocation0 [shape = 'u32[]', space=smem, size = 0x4, offset = 0x4, fixed_abs, tag = 'smem constant byte address 0x4 - core index']
  #allocation1 [shape = 'u32[144,128]{1,0:T(1,128)}', space=vmem, size = 0x12000, scoped, tag = 'internal scratch']
  %s0 = inlined_call_operand.hbm [shape: f32[8,16], index: 0, kind: input, shape index: {}]
  %s1 = inlined_call_operand.hbm [shape: bf16[16,128], index: 1, kind: input, shape index: {}]
  %s2 = inlined_call_operand.vmem [shape: f32[1,128], index: 2, kind: input, shape index: {}]
  %s3 = inlined_call_operand.hbm [shape: bf16[128,512], index: 3, kind: input, shape index: {}]
  %s4 = inlined_call_operand.vmem [shape: f32[1,512], index: 4, kind: input, shape index: {}]
  %s5 = inlined_call_operand.hbm [shape: bf16[512,512], index: 5, kind: input, shape index: {}]
  %s6 = inlined_call_operand.vmem [shape: f32[1,512], index: 6, kind: input, shape index: {}]
  %s7 = inlined_call_operand.hbm [shape: bf16[512,128], index: 7, kind: input, shape index: {}]
  %s8 = inlined_call_operand.vmem [shape: f32[1,128], index: 8, kind: input, shape index: {}]
  %s9 = inlined_call_operand.hbm [shape: bf16[128,128], index: 9, kind: input, shape index: {}]
  %s10 = inlined_call_operand.vmem [shape: f32[1,128], index: 10, kind: input, shape index: {}]
  %s11 = inlined_call_operand.hbm [shape: f32[8,128], index: 11, kind: output, shape index: {}]
  %s12 = sld [smem:[#allocation0]]
  $region78: #{tpu_custom_call.1} parent=0
    _
  %s14 = ssub.s32 1, %s12
  %s15 = scalar_select 0, %s14, %s12
  $region1: #{tpu_custom_call.1} parent=0
    #allocation2 [shape = 'u8[4096]{0}', space=vmem, size = 0x1000, scoped, tag = 'input window, operand 0, single buffered']
    #allocation3 [shape = 's32[1]{0}', space=sflag, size = 0x4, scoped, tag = 'scoped memory for tpu_custom_call.1']
    #allocation4 [shape = 's32[1]{0}', space=sflag, size = 0x4, scoped, tag = 'scoped memory for tpu_custom_call.1']
    #allocation5 [shape = 'u8[4096]{0}', space=vmem, size = 0x1000, scoped, tag = 'input window, operand 1, single buffered']
    #allocation6 [shape = 's32[1]{0}', space=sflag, size = 0x4, scoped, tag = 'scoped memory for tpu_custom_call.1']
    #allocation7 [shape = 'u8[131072]{0}', space=vmem, size = 0x20000, scoped, tag = 'input window, operand 3, single buffered']
    #allocation8 [shape = 'u8[524288]{0}', space=vmem, size = 0x80000, scoped, tag = 'input window, operand 5, single buffered']
    #allocation9 [shape = 's32[1]{0}', space=sflag, size = 0x4, scoped, tag = 'scoped memory for tpu_custom_call.1']
    #allocation10 [shape = 'u8[131072]{0}', space=vmem, size = 0x20000, scoped, tag = 'input window, operand 7, single buffered']
    #allocation11 [shape = 'u8[32768]{0}', space=vmem, size = 0x8000, scoped, tag = 'input window, operand 9, single buffered']
    #allocation12 [shape = 's32[1]{0}', space=sflag, size = 0x4, scoped, tag = 'scoped memory for tpu_custom_call.1']
    #allocation13 [shape = 'u8[4096]{0}', space=vmem, size = 0x1000, scoped, tag = 'output window, operand 0, single buffered']
    %16 = vsyncpa [#allocation3], 0
    %17 = vsyncpa [#allocation6], 0
    %18 = vsyncpa [#allocation9], 0
    %19 = vsyncpa [#allocation12], 0
    %20 = vsyncpa [#allocation4], 0
    // Predicated region
    $region2: #{tpu_custom_call.1} parent=1 // pred_check
      _
    $region3: #{tpu_custom_call.1} parent=1 // pred_check_branch
      %22 = sbr.rel (0) target = $region5
    $region4: #{tpu_custom_call.1} parent=1 // pred_region
      %s24 = ssub.s32 128, 128
      %25 = vsyncadd [#allocation3], %s24
      %s27 = sshll.u32 [#allocation2], 4
      %s28 = int_to_ptr.vmem [resolvable:$true] %s27
      %30 = dma.hbm_to_vmem [thread:$0]  %s0, 128, %s28, [#allocation3]
    $region5: #{tpu_custom_call.1} parent=1 // pred_fallthru
      _
    // Predicated region
    $region6: #{tpu_custom_call.1} parent=1 // pred_check
      _
    $region7: #{tpu_custom_call.1} parent=1 // pred_check_branch
      %32 = sbr.rel (0) target = $region9
    $region8: #{tpu_custom_call.1} parent=1 // pred_region
      %s34 = ssub.s32 128, 128
      %35 = vsyncadd [#allocation6], %s34
      %s36 = sshll.u32 [#allocation5], 4
      %s37 = int_to_ptr.vmem [resolvable:$true] %s36
      %42 = dma.hbm_to_vmem [thread:$0]  %s1, 128, %s37, [#allocation6], 64, 64, 4
    $region9: #{tpu_custom_call.1} parent=1 // pred_fallthru
      _
    // Predicated region
    $region10: #{tpu_custom_call.1} parent=1 // pred_check
      _
    $region11: #{tpu_custom_call.1} parent=1 // pred_check_branch
      %44 = sbr.rel (0) target = $region13
    $region12: #{tpu_custom_call.1} parent=1 // pred_region
      _
    $region13: #{tpu_custom_call.1} parent=1 // pred_fallthru
      _
    // Predicated region
    $region14: #{tpu_custom_call.1} parent=1 // pred_check
      _
    $region15: #{tpu_custom_call.1} parent=1 // pred_check_branch
      %46 = sbr.rel (0) target = $region17
    $region16: #{tpu_custom_call.1} parent=1 // pred_region
      %s48 = ssub.s32 4096, 4096
      %49 = vsyncadd [#allocation6], %s48
      %s50 = sshll.u32 [#allocation7], 4
      %s51 = int_to_ptr.vmem [resolvable:$true] %s50
      %56 = dma.hbm_to_vmem [thread:$0]  %s3, 4096, %s51, [#allocation6], 256, 256, 16
    $region17: #{tpu_custom_call.1} parent=1 // pred_fallthru
      _
    // Predicated region
    $region18: #{tpu_custom_call.1} parent=1 // pred_check
      _
    $region19: #{tpu_custom_call.1} parent=1 // pred_check_branch
      %58 = sbr.rel (0) target = $region21
    $region20: #{tpu_custom_call.1} parent=1 // pred_region
      _
    $region21: #{tpu_custom_call.1} parent=1 // pred_fallthru
      _
    // Predicated region
    $region22: #{tpu_custom_call.1} parent=1 // pred_check
      _
    $region23: #{tpu_custom_call.1} parent=1 // pred_check_branch
      %60 = sbr.rel (0) target = $region25
    $region24: #{tpu_custom_call.1} parent=1 // pred_region
      %s62 = ssub.s32 16384, 16384
      %63 = vsyncadd [#allocation9], %s62
      %s64 = sshll.u32 [#allocation8], 4
      %s65 = int_to_ptr.vmem [resolvable:$true] %s64
      %70 = dma.hbm_to_vmem [thread:$0]  %s5, 16384, %s65, [#allocation9], 256, 256, 16
    $region25: #{tpu_custom_call.1} parent=1 // pred_fallthru
      _
    // Predicated region
    $region26: #{tpu_custom_call.1} parent=1 // pred_check
      _
    $region27: #{tpu_custom_call.1} parent=1 // pred_check_branch
      %72 = sbr.rel (0) target = $region29
    $region28: #{tpu_custom_call.1} parent=1 // pred_region
      _
    $region29: #{tpu_custom_call.1} parent=1 // pred_fallthru
      _
    // Predicated region
    $region30: #{tpu_custom_call.1} parent=1 // pred_check
      _
    $region31: #{tpu_custom_call.1} parent=1 // pred_check_branch
      %74 = sbr.rel (0) target = $region33
    $region32: #{tpu_custom_call.1} parent=1 // pred_region
      %s76 = ssub.s32 4096, 4096
      %77 = vsyncadd [#allocation9], %s76
      %s78 = sshll.u32 [#allocation10], 4
      %s79 = int_to_ptr.vmem [resolvable:$true] %s78
      %84 = dma.hbm_to_vmem [thread:$0]  %s7, 4096, %s79, [#allocation9], 64, 64, 4
    $region33: #{tpu_custom_call.1} parent=1 // pred_fallthru
      _
    // Predicated region
    $region34: #{tpu_custom_call.1} parent=1 // pred_check
      _
    $region35: #{tpu_custom_call.1} parent=1 // pred_check_branch
      %86 = sbr.rel (0) target = $region37
    $region36: #{tpu_custom_call.1} parent=1 // pred_region
      _
    $region37: #{tpu_custom_call.1} parent=1 // pred_fallthru
      _
    // Predicated region
    $region38: #{tpu_custom_call.1} parent=1 // pred_check
      _
    $region39: #{tpu_custom_call.1} parent=1 // pred_check_branch
      %88 = sbr.rel (0) target = $region41
    $region40: #{tpu_custom_call.1} parent=1 // pred_region
      %s90 = ssub.s32 1024, 1024
      %91 = vsyncadd [#allocation12], %s90
      %s92 = sshll.u32 [#allocation11], 4
      %s93 = int_to_ptr.vmem [resolvable:$true] %s92
      %98 = dma.hbm_to_vmem [thread:$0]  %s9, 1024, %s93, [#allocation12], 64, 64, 4
    $region41: #{tpu_custom_call.1} parent=1 // pred_fallthru
      _
    // Predicated region
    $region42: #{tpu_custom_call.1} parent=1 // pred_check
      _
    $region43: #{tpu_custom_call.1} parent=1 // pred_check_branch
      %100 = sbr.rel (0) target = $region45
    $region44: #{tpu_custom_call.1} parent=1 // pred_region
      _
    $region45: #{tpu_custom_call.1} parent=1 // pred_fallthru
      _
    // Predicated region
    $region46: #{tpu_custom_call.1} parent=1 // pred_check
      _
    $region47: #{tpu_custom_call.1} parent=1 // pred_check_branch
      %102 = sbr.rel (0) target = $region49
    $region48: #{tpu_custom_call.1} parent=1 // pred_region
      %103 = dma.done [#allocation3], 128
    $region49: #{tpu_custom_call.1} parent=1 // pred_fallthru
      _
    // Predicated region
    $region50: #{tpu_custom_call.1} parent=1 // pred_check
      _
    $region51: #{tpu_custom_call.1} parent=1 // pred_check_branch
      %105 = sbr.rel (0) target = $region53
    $region52: #{tpu_custom_call.1} parent=1 // pred_region
      %106 = dma.done [#allocation6], 128
    $region53: #{tpu_custom_call.1} parent=1 // pred_fallthru
      _
    // Predicated region
    $region54: #{tpu_custom_call.1} parent=1 // pred_check
      _
    $region55: #{tpu_custom_call.1} parent=1 // pred_check_branch
      %108 = sbr.rel (0) target = $region57
    $region56: #{tpu_custom_call.1} parent=1 // pred_region
      %109 = dma.done [#allocation6], 4096
    $region57: #{tpu_custom_call.1} parent=1 // pred_fallthru
      _
    // Predicated region
    $region58: #{tpu_custom_call.1} parent=1 // pred_check
      _
    $region59: #{tpu_custom_call.1} parent=1 // pred_check_branch
      %111 = sbr.rel (0) target = $region61
    $region60: #{tpu_custom_call.1} parent=1 // pred_region
      %112 = dma.done [#allocation9], 16384
    $region61: #{tpu_custom_call.1} parent=1 // pred_fallthru
      _
    // Predicated region
    $region62: #{tpu_custom_call.1} parent=1 // pred_check
      _
    $region63: #{tpu_custom_call.1} parent=1 // pred_check_branch
      %114 = sbr.rel (0) target = $region65
    $region64: #{tpu_custom_call.1} parent=1 // pred_region
      %115 = dma.done [#allocation9], 4096
    $region65: #{tpu_custom_call.1} parent=1 // pred_fallthru
      _
    // Predicated region
    $region66: #{tpu_custom_call.1} parent=1 // pred_check
      _
    $region67: #{tpu_custom_call.1} parent=1 // pred_check_branch
      %117 = sbr.rel (0) target = $region69
    $region68: #{tpu_custom_call.1} parent=1 // pred_region
      %118 = dma.done [#allocation12], 1024
    $region69: #{tpu_custom_call.1} parent=1 // pred_fallthru
      _
    %v120 = vld [vmem:[#allocation2] sm:$0xff]
    %v121 = vpack.c.bf16 %v120, %v120
    %v122 = vld [vmem:[#allocation5] sm:$0xf]
    %v123 = vld [vmem:[#allocation5 + $0x4] sm:$0xf]
    %v124 = vld [vmem:[%s2] sm:$0x1]
    %v126 = vlaneseq
    %v127 = vshrl.u32 %v126, 7
    %v128 = vsub.s32 0, %v127
    %v129 = vrot.slane %v124, %v128
    %v133 = vunpack.c.l.b16 %v122
    %v134 = vunpack.c.l.b16 %v123
    %v135 = vpack.c.b16 %v134, %v133
    %vm137 = vcmask 130048
    %v139 = vsel %vm137, %v121, 0
    %141 = vmatprep.subr.bf16.mxu0 0
    %142 = vmatpush1.bf16.msra.mxu0 0
    %143 = vmatprep.subr.bf16.mxu0 0
    %144 = vmatpush1.bf16.msra.mxu0 0
    %145 = vmatprep.subr.bf16.mxu0 0
    %146 = vmatpush1.bf16.msra.mxu0 0
    %147 = vmatprep.subr.bf16.mxu0 0
    %148 = vmatpush1.bf16.msra.mxu0 0
    %149 = vmatprep.subr.bf16.mxu0 0
    %150 = vmatpush1.bf16.msra.mxu0 0
    %151 = vmatprep.subr.bf16.mxu0 0
    %152 = vmatpush1.bf16.msra.mxu0 0
    %153 = vmatprep.subr.bf16.mxu0 0
    %154 = vmatpush1.bf16.msra.mxu0 0
    %155 = vmatprep.subr.bf16.mxu0 0
    %156 = vmatpush1.bf16.msra.mxu0 %v135
    %157 = vmatprep.subr.bf16.mxu0 0
    %158 = vmatpush2.bf16.msra.mxu0 0
    %159 = vmatprep.subr.bf16.mxu0 0
    %160 = vmatpush2.bf16.msra.mxu0 0
    %161 = vmatprep.subr.bf16.mxu0 0
    %162 = vmatpush2.bf16.msra.mxu0 0
    %163 = vmatprep.subr.bf16.mxu0 0
    %164 = vmatpush2.bf16.msra.mxu0 0
    %165 = vmatprep.subr.bf16.mxu0 0
    %166 = vmatpush2.bf16.msra.mxu0 0
    %167 = vmatprep.subr.bf16.mxu0 0
    %168 = vmatpush2.bf16.msra.mxu0 0
    %169 = vmatprep.subr.bf16.mxu0 0
    %170 = vmatpush2.bf16.msra.mxu0 0
    %171 = vmatprep.subr.bf16.mxu0 0
    %172 = vmatpush2.bf16.msra.mxu0 0
    %173 = vmatprep.mubr.bf16.mxu0 0
    %174 = vmatmul.mubr.bf16.gmra.mxu0 %v139
    %v175 = vpop.f32.mrf.mxu0
    %v176 = vadd.f32 %v129, %v175
    %v177 = vpop.f32.mrf.mxu0
    %v178 = vpop.f32.mrf.mxu0
    %v179 = vpop.f32.mrf.mxu0
    %180 = vdwg.mxu0
    %v181 = vmax.f32 %v176, 0.0
    %v182 = vpack.c.bf16 %v181, %v181
    %v183 = vld [vmem:[#allocation7] sm:$0xff]
    %v184 = vld [vmem:[#allocation7 + $0x8] sm:$0xff]
    %v185 = vld [vmem:[#allocation7 + $0x10] sm:$0xff]
    %v186 = vld [vmem:[#allocation7 + $0x18] sm:$0xff]
    %v187 = vld [vmem:[#allocation7 + $0x20] sm:$0xff]
    %v188 = vld [vmem:[#allocation7 + $0x28] sm:$0xff]
    %v189 = vld [vmem:[#allocation7 + $0x30] sm:$0xff]
    %v190 = vld [vmem:[#allocation7 + $0x38] sm:$0xff]
    %v191 = vld [vmem:[#allocation7 + $0x40] sm:$0xff]
    %v192 = vld [vmem:[#allocation7 + $0x48] sm:$0xff]
    %v193 = vld [vmem:[#allocation7 + $0x50] sm:$0xff]
    %v194 = vld [vmem:[#allocation7 + $0x58] sm:$0xff]
    %v195 = vld [vmem:[#allocation7 + $0x60] sm:$0xff]
    %v196 = vld [vmem:[#allocation7 + $0x68] sm:$0xff]
    %v197 = vld [vmem:[#allocation7 + $0x70] sm:$0xff]
    %v198 = vld [vmem:[#allocation7 + $0x78] sm:$0xff]
    %v199 = vld [vmem:[#allocation7 + $0x80] sm:$0xff]
    %v200 = vld [vmem:[#allocation7 + $0x88] sm:$0xff]
    %v201 = vld [vmem:[#allocation7 + $0x90] sm:$0xff]
    %v202 = vld [vmem:[#allocation7 + $0x98] sm:$0xff]
    %v203 = vld [vmem:[#allocation7 + $0xa0] sm:$0xff]
    %v204 = vld [vmem:[#allocation7 + $0xa8] sm:$0xff]
    %v205 = vld [vmem:[#allocation7 + $0xb0] sm:$0xff]
    %v206 = vld [vmem:[#allocation7 + $0xb8] sm:$0xff]
    %v207 = vld [vmem:[#allocation7 + $0xc0] sm:$0xff]
    %v208 = vld [vmem:[#allocation7 + $0xc8] sm:$0xff]
    %v209 = vld [vmem:[#allocation7 + $0xd0] sm:$0xff]
    %v210 = vld [vmem:[#allocation7 + $0xd8] sm:$0xff]
    %v211 = vld [vmem:[#allocation7 + $0xe0] sm:$0xff]
    %v212 = vld [vmem:[#allocation7 + $0xe8] sm:$0xff]
    %v213 = vld [vmem:[#allocation7 + $0xf0] sm:$0xff]
    %v214 = vld [vmem:[#allocation7 + $0xf8] sm:$0xff]
    %v215 = vld [vmem:[%s4] sm:$0xf]
    %v217 = vlaneseq
    %v218 = vshrl.u32 %v217, 7
    %v219 = vsub.s32 0, %v218
    %v220 = vrot.slane %v215, %v219
    %v221 = vlaneseq
    %v222 = vshrl.u32 %v221, 7
    %v223 = vsub.s32 1, %v222
    %v224 = vrot.slane %v215, %v223
    %v225 = vlaneseq
    %v226 = vshrl.u32 %v225, 7
    %v227 = vsub.s32 2, %v226
    %v228 = vrot.slane %v215, %v227
    %v229 = vlaneseq
    %v230 = vshrl.u32 %v229, 7
    %v231 = vsub.s32 3, %v230
    %v232 = vrot.slane %v215, %v231
    %v269 = vunpack.c.l.b16 %v183
    %v270 = vunpack.c.h.b16 %v183
    %v271 = vunpack.c.l.b16 %v184
    %v272 = vunpack.c.h.b16 %v184
    %v273 = vunpack.c.l.b16 %v185
    %v274 = vunpack.c.h.b16 %v185
    %v275 = vunpack.c.l.b16 %v186
    %v276 = vunpack.c.h.b16 %v186
    %v277 = vunpack.c.l.b16 %v187
    %v278 = vunpack.c.h.b16 %v187
    %v279 = vunpack.c.l.b16 %v188
    %v280 = vunpack.c.h.b16 %v188
    %v281 = vunpack.c.l.b16 %v189
    %v282 = vunpack.c.h.b16 %v189
    %v283 = vunpack.c.l.b16 %v190
    %v284 = vunpack.c.h.b16 %v190
    %v285 = vunpack.c.l.b16 %v191
    %v286 = vunpack.c.h.b16 %v191
    %v287 = vunpack.c.l.b16 %v192
    %v288 = vunpack.c.h.b16 %v192
    %v289 = vunpack.c.l.b16 %v193
    %v290 = vunpack.c.h.b16 %v193
    %v291 = vunpack.c.l.b16 %v194
    %v292 = vunpack.c.h.b16 %v194
    %v293 = vunpack.c.l.b16 %v195
    %v294 = vunpack.c.h.b16 %v195
    %v295 = vunpack.c.l.b16 %v196
    %v296 = vunpack.c.h.b16 %v196
    %v297 = vunpack.c.l.b16 %v197
    %v298 = vunpack.c.h.b16 %v197
    %v299 = vunpack.c.l.b16 %v198
    %v300 = vunpack.c.h.b16 %v198
    %v301 = vunpack.c.l.b16 %v199
    %v302 = vunpack.c.h.b16 %v199
    %v303 = vunpack.c.l.b16 %v200
    %v304 = vunpack.c.h.b16 %v200
    %v305 = vunpack.c.l.b16 %v201
    %v306 = vunpack.c.h.b16 %v201
    %v307 = vunpack.c.l.b16 %v202
    %v308 = vunpack.c.h.b16 %v202
    %v309 = vunpack.c.l.b16 %v203
    %v310 = vunpack.c.h.b16 %v203
    %v311 = vunpack.c.l.b16 %v204
    %v312 = vunpack.c.h.b16 %v204
    %v313 = vunpack.c.l.b16 %v205
    %v314 = vunpack.c.h.b16 %v205
    %v315 = vunpack.c.l.b16 %v206
    %v316 = vunpack.c.h.b16 %v206
    %v317 = vunpack.c.l.b16 %v207
    %v318 = vunpack.c.h.b16 %v207
    %v319 = vunpack.c.l.b16 %v208
    %v320 = vunpack.c.h.b16 %v208
    %v321 = vunpack.c.l.b16 %v209
    %v322 = vunpack.c.h.b16 %v209
    %v323 = vunpack.c.l.b16 %v210
    %v324 = vunpack.c.h.b16 %v210
    %v325 = vunpack.c.l.b16 %v211
    %v326 = vunpack.c.h.b16 %v211
    %v327 = vunpack.c.l.b16 %v212
    %v328 = vunpack.c.h.b16 %v212
    %v329 = vunpack.c.l.b16 %v213
    %v330 = vunpack.c.h.b16 %v213
    %v331 = vunpack.c.l.b16 %v214
    %v332 = vunpack.c.h.b16 %v214
    %v333 = vpack.c.b16 %v273, %v269
    %v334 = vpack.c.b16 %v274, %v270
    %v335 = vpack.c.b16 %v275, %v271
    %v336 = vpack.c.b16 %v276, %v272
    %v337 = vpack.c.b16 %v281, %v277
    %v338 = vpack.c.b16 %v282, %v278
    %v339 = vpack.c.b16 %v283, %v279
    %v340 = vpack.c.b16 %v284, %v280
    %v341 = vpack.c.b16 %v289, %v285
    %v342 = vpack.c.b16 %v290, %v286
    %v343 = vpack.c.b16 %v291, %v287
    %v344 = vpack.c.b16 %v292, %v288
    %v345 = vpack.c.b16 %v297, %v293
    %v346 = vpack.c.b16 %v298, %v294
    %v347 = vpack.c.b16 %v299, %v295
    %v348 = vpack.c.b16 %v300, %v296
    %v349 = vpack.c.b16 %v305, %v301
    %v350 = vpack.c.b16 %v306, %v302
    %v351 = vpack.c.b16 %v307, %v303
    %v352 = vpack.c.b16 %v308, %v304
    %v353 = vpack.c.b16 %v313, %v309
    %v354 = vpack.c.b16 %v314, %v310
    %v355 = vpack.c.b16 %v315, %v311
    %v356 = vpack.c.b16 %v316, %v312
    %v357 = vpack.c.b16 %v321, %v317
    %v358 = vpack.c.b16 %v322, %v318
    %v359 = vpack.c.b16 %v323, %v319
    %v360 = vpack.c.b16 %v324, %v320
    %v361 = vpack.c.b16 %v329, %v325
    %v362 = vpack.c.b16 %v330, %v326
    %v363 = vpack.c.b16 %v331, %v327
    %v364 = vpack.c.b16 %v332, %v328
    %397 = vmatprep.subr.bf16.mxu0 %v362
    %398 = vmatpush1.bf16.msra.mxu0 %v361
    %399 = vmatprep.subr.bf16.mxu0 %v358
    %400 = vmatpush1.bf16.msra.mxu0 %v357
    %401 = vmatprep.subr.bf16.mxu0 %v354
    %402 = vmatpush1.bf16.msra.mxu0 %v353
    %403 = vmatprep.subr.bf16.mxu0 %v350
    %404 = vmatpush1.bf16.msra.mxu0 %v349
    %405 = vmatprep.subr.bf16.mxu0 %v346
    %406 = vmatpush1.bf16.msra.mxu0 %v345
    %407 = vmatprep.subr.bf16.mxu0 %v342
    %408 = vmatpush1.bf16.msra.mxu0 %v341
    %409 = vmatprep.subr.bf16.mxu0 %v338
    %410 = vmatpush1.bf16.msra.mxu0 %v337
    %411 = vmatprep.subr.bf16.mxu0 %v334
    %412 = vmatpush1.bf16.msra.mxu0 %v333
    %413 = vmatprep.subr.bf16.mxu0 0
    %414 = vmatpush2.bf16.msra.mxu0 0
    %415 = vmatprep.subr.bf16.mxu0 0
    %416 = vmatpush2.bf16.msra.mxu0 0
    %417 = vmatprep.subr.bf16.mxu0 0
    %418 = vmatpush2.bf16.msra.mxu0 0
    %419 = vmatprep.subr.bf16.mxu0 0
    %420 = vmatpush2.bf16.msra.mxu0 0
    %421 = vmatprep.subr.bf16.mxu0 0
    %422 = vmatpush2.bf16.msra.mxu0 0
    %423 = vmatprep.subr.bf16.mxu0 0
    %424 = vmatpush2.bf16.msra.mxu0 0
    %425 = vmatprep.subr.bf16.mxu0 0
    %426 = vmatpush2.bf16.msra.mxu0 0
    %427 = vmatprep.subr.bf16.mxu0 0
    %428 = vmatpush2.bf16.msra.mxu0 0
    %429 = vmatprep.mubr.bf16.mxu0 0
    %430 = vmatmul.mubr.bf16.gmra.mxu0 %v182
    %v431 = vpop.f32.mrf.mxu0
    %v432 = vadd.f32 %v220, %v431
    %v433 = vpop.f32.mrf.mxu0
    %v434 = vadd.f32 %v224, %v433
    %v435 = vpop.f32.mrf.mxu0
    %v436 = vpop.f32.mrf.mxu0
    %437 = vdwg.mxu0
    %438 = vmatprep.subr.bf16.mxu0 %v364
    %439 = vmatpush1.bf16.msra.mxu0 %v363
    %440 = vmatprep.subr.bf16.mxu0 %v360
    %441 = vmatpush1.bf16.msra.mxu0 %v359
    %442 = vmatprep.subr.bf16.mxu0 %v356
    %443 = vmatpush1.bf16.msra.mxu0 %v355
    %444 = vmatprep.subr.bf16.mxu0 %v352
    %445 = vmatpush1.bf16.msra.mxu0 %v351
    %446 = vmatprep.subr.bf16.mxu0 %v348
    %447 = vmatpush1.bf16.msra.mxu0 %v347
    %448 = vmatprep.subr.bf16.mxu0 %v344
    %449 = vmatpush1.bf16.msra.mxu0 %v343
    %450 = vmatprep.subr.bf16.mxu0 %v340
    %451 = vmatpush1.bf16.msra.mxu0 %v339
    %452 = vmatprep.subr.bf16.mxu0 %v336
    %453 = vmatpush1.bf16.msra.mxu0 %v335
    %454 = vmatprep.subr.bf16.mxu0 0
    %455 = vmatpush2.bf16.msra.mxu0 0
    %456 = vmatprep.subr.bf16.mxu0 0
    %457 = vmatpush2.bf16.msra.mxu0 0
    %458 = vmatprep.subr.bf16.mxu0 0
    %459 = vmatpush2.bf16.msra.mxu0 0
    %460 = vmatprep.subr.bf16.mxu0 0
    %461 = vmatpush2.bf16.msra.mxu0 0
    %462 = vmatprep.subr.bf16.mxu0 0
    %463 = vmatpush2.bf16.msra.mxu0 0
    %464 = vmatprep.subr.bf16.mxu0 0
    %465 = vmatpush2.bf16.msra.mxu0 0
    %466 = vmatprep.subr.bf16.mxu0 0
    %467 = vmatpush2.bf16.msra.mxu0 0
    %468 = vmatprep.subr.bf16.mxu0 0
    %469 = vmatpush2.bf16.msra.mxu0 0
    %470 = vmatprep.mubr.bf16.mxu0 0
    %471 = vmatmul.mubr.bf16.gmra.mxu0 %v182
    %v472 = vpop.f32.mrf.mxu0
    %v473 = vadd.f32 %v228, %v472
    %v474 = vpop.f32.mrf.mxu0
    %v475 = vadd.f32 %v232, %v474
    %v476 = vpop.f32.mrf.mxu0
    %v477 = vpop.f32.mrf.mxu0
    %478 = vdwg.mxu0
    %v479 = vmax.f32 %v432, 0.0
    %v480 = vmax.f32 %v434, 0.0
    %v481 = vmax.f32 %v473, 0.0
    %v482 = vmax.f32 %v475, 0.0
    %v483 = vpack.c.bf16 %v479, %v479
    %v484 = vpack.c.bf16 %v480, %v480
    %v485 = vpack.c.bf16 %v481, %v481
    %v486 = vpack.c.bf16 %v482, %v482
    %v487 = vld [vmem:[#allocation8] sm:$0xff]
    %v488 = vld [vmem:[#allocation8 + $0x8] sm:$0xff]
    %v489 = vld [vmem:[#allocation8 + $0x10] sm:$0xff]
    %v490 = vld [vmem:[#allocation8 + $0x18] sm:$0xff]
    %v491 = vld [vmem:[#allocation8 + $0x20] sm:$0xff]
    %v492 = vld [vmem:[#allocation8 + $0x28] sm:$0xff]
    %v493 = vld [vmem:[#allocation8 + $0x30] sm:$0xff]
    %v494 = vld [vmem:[#allocation8 + $0x38] sm:$0xff]
    %v495 = vld [vmem:[#allocation8 + $0x40] sm:$0xff]
    %v496 = vld [vmem:[#allocation8 + $0x48] sm:$0xff]
    %v497 = vld [vmem:[#allocation8 + $0x50] sm:$0xff]
    %v498 = vld [vmem:[#allocation8 + $0x58] sm:$0xff]
    %v499 = vld [vmem:[#allocation8 + $0x60] sm:$0xff]
    %v500 = vld [vmem:[#allocation8 + $0x68] sm:$0xff]
    %v501 = vld [vmem:[#allocation8 + $0x70] sm:$0xff]
    %v502 = vld [vmem:[#allocation8 + $0x78] sm:$0xff]
    %v503 = vld [vmem:[#allocation8 + $0x80] sm:$0xff]
    %v504 = vld [vmem:[#allocation8 + $0x88] sm:$0xff]
    %v505 = vld [vmem:[#allocation8 + $0x90] sm:$0xff]
    %v506 = vld [vmem:[#allocation8 + $0x98] sm:$0xff]
    %v507 = vld [vmem:[#allocation8 + $0xa0] sm:$0xff]
    %v508 = vld [vmem:[#allocation8 + $0xa8] sm:$0xff]
    %v509 = vld [vmem:[#allocation8 + $0xb0] sm:$0xff]
    %v510 = vld [vmem:[#allocation8 + $0xb8] sm:$0xff]
    %v511 = vld [vmem:[#allocation8 + $0xc0] sm:$0xff]
    %v512 = vld [vmem:[#allocation8 + $0xc8] sm:$0xff]
    %v513 = vld [vmem:[#allocation8 + $0xd0] sm:$0xff]
    %v514 = vld [vmem:[#allocation8 + $0xd8] sm:$0xff]
    %v515 = vld [vmem:[#allocation8 + $0xe0] sm:$0xff]
    %v516 = vld [vmem:[#allocation8 + $0xe8] sm:$0xff]
    %v517 = vld [vmem:[#allocation8 + $0xf0] sm:$0xff]
    %v518 = vld [vmem:[#allocation8 + $0xf8] sm:$0xff]
    %v519 = vld [vmem:[#allocation8 + $0x100] sm:$0xff]
    %v520 = vld [vmem:[#allocation8 + $0x108] sm:$0xff]
    %v521 = vld [vmem:[#allocation8 + $0x110] sm:$0xff]
    %v522 = vld [vmem:[#allocation8 + $0x118] sm:$0xff]
    %v523 = vld [vmem:[#allocation8 + $0x120] sm:$0xff]
    %v524 = vld [vmem:[#allocation8 + $0x128] sm:$0xff]
    %v525 = vld [vmem:[#allocation8 + $0x130] sm:$0xff]
    %v526 = vld [vmem:[#allocation8 + $0x138] sm:$0xff]
    %v527 = vld [vmem:[#allocation8 + $0x140] sm:$0xff]
    %v528 = vld [vmem:[#allocation8 + $0x148] sm:$0xff]
    %v529 = vld [vmem:[#allocation8 + $0x150] sm:$0xff]
    %v530 = vld [vmem:[#allocation8 + $0x158] sm:$0xff]
    %v531 = vld [vmem:[#allocation8 + $0x160] sm:$0xff]
    %v532 = vld [vmem:[#allocation8 + $0x168] sm:$0xff]
    %v533 = vld [vmem:[#allocation8 + $0x170] sm:$0xff]
    %v534 = vld [vmem:[#allocation8 + $0x178] sm:$0xff]
    %v535 = vld [vmem:[#allocation8 + $0x180] sm:$0xff]
    %v536 = vld [vmem:[#allocation8 + $0x188] sm:$0xff]
    %v537 = vld [vmem:[#allocation8 + $0x190] sm:$0xff]
    %v538 = vld [vmem:[#allocation8 + $0x198] sm:$0xff]
    %v539 = vld [vmem:[#allocation8 + $0x1a0] sm:$0xff]
    %v540 = vld [vmem:[#allocation8 + $0x1a8] sm:$0xff]
    %v541 = vld [vmem:[#allocation8 + $0x1b0] sm:$0xff]
    %v542 = vld [vmem:[#allocation8 + $0x1b8] sm:$0xff]
    %v543 = vld [vmem:[#allocation8 + $0x1c0] sm:$0xff]
    %v544 = vld [vmem:[#allocation8 + $0x1c8] sm:$0xff]
    %v545 = vld [vmem:[#allocation8 + $0x1d0] sm:$0xff]
    %v546 = vld [vmem:[#allocation8 + $0x1d8] sm:$0xff]
    %v547 = vld [vmem:[#allocation8 + $0x1e0] sm:$0xff]
    %v548 = vld [vmem:[#allocation8 + $0x1e8] sm:$0xff]
    %v549 = vld [vmem:[#allocation8 + $0x1f0] sm:$0xff]
    %v550 = vld [vmem:[#allocation8 + $0x1f8] sm:$0xff]
    %v551 = vld [vmem:[#allocation8 + $0x200] sm:$0xff]
    %v552 = vld [vmem:[#allocation8 + $0x208] sm:$0xff]
    %v553 = vld [vmem:[#allocation8 + $0x210] sm:$0xff]
    %v554 = vld [vmem:[#allocation8 + $0x218] sm:$0xff]
    %v555 = vld [vmem:[#allocation8 + $0x220] sm:$0xff]
    %v556 = vld [vmem:[#allocation8 + $0x228] sm:$0xff]
    %v557 = vld [vmem:[#allocation8 + $0x230] sm:$0xff]
    %v558 = vld [vmem:[#allocation8 + $0x238] sm:$0xff]
    %v559 = vld [vmem:[#allocation8 + $0x240] sm:$0xff]
    %v560 = vld [vmem:[#allocation8 + $0x248] sm:$0xff]
    %v561 = vld [vmem:[#allocation8 + $0x250] sm:$0xff]
    %v562 = vld [vmem:[#allocation8 + $0x258] sm:$0xff]
    %v563 = vld [vmem:[#allocation8 + $0x260] sm:$0xff]
    %v564 = vld [vmem:[#allocation8 + $0x268] sm:$0xff]
    %v565 = vld [vmem:[#allocation8 + $0x270] sm:$0xff]
    %v566 = vld [vmem:[#allocation8 + $0x278] sm:$0xff]
    %v567 = vld [vmem:[#allocation8 + $0x280] sm:$0xff]
    %v568 = vld [vmem:[#allocation8 + $0x288] sm:$0xff]
    %v569 = vld [vmem:[#allocation8 + $0x290] sm:$0xff]
    %v570 = vld [vmem:[#allocation8 + $0x298] sm:$0xff]
    %v571 = vld [vmem:[#allocation8 + $0x2a0] sm:$0xff]
    %v572 = vld [vmem:[#allocation8 + $0x2a8] sm:$0xff]
    %v573 = vld [vmem:[#allocation8 + $0x2b0] sm:$0xff]
    %v574 = vld [vmem:[#allocation8 + $0x2b8] sm:$0xff]
    %v575 = vld [vmem:[#allocation8 + $0x2c0] sm:$0xff]
    %v576 = vld [vmem:[#allocation8 + $0x2c8] sm:$0xff]
    %v577 = vld [vmem:[#allocation8 + $0x2d0] sm:$0xff]
    %v578 = vld [vmem:[#allocation8 + $0x2d8] sm:$0xff]
    %v579 = vld [vmem:[#allocation8 + $0x2e0] sm:$0xff]
    %v580 = vld [vmem:[#allocation8 + $0x2e8] sm:$0xff]
    %v581 = vld [vmem:[#allocation8 + $0x2f0] sm:$0xff]
    %v582 = vld [vmem:[#allocation8 + $0x2f8] sm:$0xff]
    %v583 = vld [vmem:[#allocation8 + $0x300] sm:$0xff]
    %v584 = vld [vmem:[#allocation8 + $0x308] sm:$0xff]
    %v585 = vld [vmem:[#allocation8 + $0x310] sm:$0xff]
    %v586 = vld [vmem:[#allocation8 + $0x318] sm:$0xff]
    %v587 = vld [vmem:[#allocation8 + $0x320] sm:$0xff]
    %v588 = vld [vmem:[#allocation8 + $0x328] sm:$0xff]
    %v589 = vld [vmem:[#allocation8 + $0x330] sm:$0xff]
    %v590 = vld [vmem:[#allocation8 + $0x338] sm:$0xff]
    %v591 = vld [vmem:[#allocation8 + $0x340] sm:$0xff]
    %v592 = vld [vmem:[#allocation8 + $0x348] sm:$0xff]
    %v593 = vld [vmem:[#allocation8 + $0x350] sm:$0xff]
    %v594 = vld [vmem:[#allocation8 + $0x358] sm:$0xff]
    %v595 = vld [vmem:[#allocation8 + $0x360] sm:$0xff]
    %v596 = vld [vmem:[#allocation8 + $0x368] sm:$0xff]
    %v597 = vld [vmem:[#allocation8 + $0x370] sm:$0xff]
    %v598 = vld [vmem:[#allocation8 + $0x378] sm:$0xff]
    %v599 = vld [vmem:[#allocation8 + $0x380] sm:$0xff]
    %v600 = vld [vmem:[#allocation8 + $0x388] sm:$0xff]
    %v601 = vld [vmem:[#allocation8 + $0x390] sm:$0xff]
    %v602 = vld [vmem:[#allocation8 + $0x398] sm:$0xff]
    %v603 = vld [vmem:[#allocation8 + $0x3a0] sm:$0xff]
    %v604 = vld [vmem:[#allocation8 + $0x3a8] sm:$0xff]
    %v605 = vld [vmem:[#allocation8 + $0x3b0] sm:$0xff]
    %v606 = vld [vmem:[#allocation8 + $0x3b8] sm:$0xff]
    %v607 = vld [vmem:[#allocation8 + $0x3c0] sm:$0xff]
    %v608 = vld [vmem:[#allocation8 + $0x3c8] sm:$0xff]
    %v609 = vld [vmem:[#allocation8 + $0x3d0] sm:$0xff]
    %v610 = vld [vmem:[#allocation8 + $0x3d8] sm:$0xff]
    %v611 = vld [vmem:[#allocation8 + $0x3e0] sm:$0xff]
    %v612 = vld [vmem:[#allocation8 + $0x3e8] sm:$0xff]
    %v613 = vld [vmem:[#allocation8 + $0x3f0] sm:$0xff]
    %v614 = vld [vmem:[#allocation8 + $0x3f8] sm:$0xff]
    %v615 = vld [vmem:[%s6] sm:$0xf]
    %v617 = vlaneseq
    %v618 = vshrl.u32 %v617, 7
    %v619 = vsub.s32 0, %v618
    %v620 = vrot.slane %v615, %v619
    %v621 = vlaneseq
    %v622 = vshrl.u32 %v621, 7
    %v623 = vsub.s32 1, %v622
    %v624 = vrot.slane %v615, %v623
    %v625 = vlaneseq
    %v626 = vshrl.u32 %v625, 7
    %v627 = vsub.s32 2, %v626
    %v628 = vrot.slane %v615, %v627
    %v629 = vlaneseq
    %v630 = vshrl.u32 %v629, 7
    %v631 = vsub.s32 3, %v630
    %v632 = vrot.slane %v615, %v631
    %v765 = vunpack.c.l.b16 %v487
    %v766 = vunpack.c.h.b16 %v487
    %v767 = vunpack.c.l.b16 %v488
    %v768 = vunpack.c.h.b16 %v488
    %v769 = vunpack.c.l.b16 %v489
    %v770 = vunpack.c.h.b16 %v489
    %v771 = vunpack.c.l.b16 %v490
    %v772 = vunpack.c.h.b16 %v490
    %v773 = vunpack.c.l.b16 %v491
    %v774 = vunpack.c.h.b16 %v491
    %v775 = vunpack.c.l.b16 %v492
    %v776 = vunpack.c.h.b16 %v492
    %v777 = vunpack.c.l.b16 %v493
    %v778 = vunpack.c.h.b16 %v493
    %v779 = vunpack.c.l.b16 %v494
    %v780 = vunpack.c.h.b16 %v494
    %v781 = vunpack.c.l.b16 %v495
    %v782 = vunpack.c.h.b16 %v495
    %v783 = vunpack.c.l.b16 %v496
    %v784 = vunpack.c.h.b16 %v496
    %v785 = vunpack.c.l.b16 %v497
    %v786 = vunpack.c.h.b16 %v497
    %v787 = vunpack.c.l.b16 %v498
    %v788 = vunpack.c.h.b16 %v498
    %v789 = vunpack.c.l.b16 %v499
    %v790 = vunpack.c.h.b16 %v499
    %v791 = vunpack.c.l.b16 %v500
    %v792 = vunpack.c.h.b16 %v500
    %v793 = vunpack.c.l.b16 %v501
    %v794 = vunpack.c.h.b16 %v501
    %v795 = vunpack.c.l.b16 %v502
    %v796 = vunpack.c.h.b16 %v502
    %v797 = vunpack.c.l.b16 %v503
    %v798 = vunpack.c.h.b16 %v503
    %v799 = vunpack.c.l.b16 %v504
    %v800 = vunpack.c.h.b16 %v504
    %v801 = vunpack.c.l.b16 %v505
    %v802 = vunpack.c.h.b16 %v505
    %v803 = vunpack.c.l.b16 %v506
    %v804 = vunpack.c.h.b16 %v506
    %v805 = vunpack.c.l.b16 %v507
    %v806 = vunpack.c.h.b16 %v507
    %v807 = vunpack.c.l.b16 %v508
    %v808 = vunpack.c.h.b16 %v508
    %v809 = vunpack.c.l.b16 %v509
    %v810 = vunpack.c.h.b16 %v509
    %v811 = vunpack.c.l.b16 %v510
    %v812 = vunpack.c.h.b16 %v510
    %v813 = vunpack.c.l.b16 %v511
    %v814 = vunpack.c.h.b16 %v511
    %v815 = vunpack.c.l.b16 %v512
    %v816 = vunpack.c.h.b16 %v512
    %v817 = vunpack.c.l.b16 %v513
    %v818 = vunpack.c.h.b16 %v513
    %v819 = vunpack.c.l.b16 %v514
    %v820 = vunpack.c.h.b16 %v514
    %v821 = vunpack.c.l.b16 %v515
    %v822 = vunpack.c.h.b16 %v515
    %v823 = vunpack.c.l.b16 %v516
    %v824 = vunpack.c.h.b16 %v516
    %v825 = vunpack.c.l.b16 %v517
    %v826 = vunpack.c.h.b16 %v517
    %v827 = vunpack.c.l.b16 %v518
    %v828 = vunpack.c.h.b16 %v518
    %v829 = vunpack.c.l.b16 %v519
    %v830 = vunpack.c.h.b16 %v519
    %v831 = vunpack.c.l.b16 %v520
    %v832 = vunpack.c.h.b16 %v520
    %v833 = vunpack.c.l.b16 %v521
    %v834 = vunpack.c.h.b16 %v521
    %v835 = vunpack.c.l.b16 %v522
    %v836 = vunpack.c.h.b16 %v522
    %v837 = vunpack.c.l.b16 %v523
    %v838 = vunpack.c.h.b16 %v523
    %v839 = vunpack.c.l.b16 %v524
    %v840 = vunpack.c.h.b16 %v524
    %v841 = vunpack.c.l.b16 %v525
    %v842 = vunpack.c.h.b16 %v525
    %v843 = vunpack.c.l.b16 %v526
    %v844 = vunpack.c.h.b16 %v526
    %v845 = vunpack.c.l.b16 %v527
    %v846 = vunpack.c.h.b16 %v527
    %v847 = vunpack.c.l.b16 %v528
    %v848 = vunpack.c.h.b16 %v528
    %v849 = vunpack.c.l.b16 %v529
    %v850 = vunpack.c.h.b16 %v529
    %v851 = vunpack.c.l.b16 %v530
    %v852 = vunpack.c.h.b16 %v530
    %v853 = vunpack.c.l.b16 %v531
    %v854 = vunpack.c.h.b16 %v531
    %v855 = vunpack.c.l.b16 %v532
    %v856 = vunpack.c.h.b16 %v532
    %v857 = vunpack.c.l.b16 %v533
    %v858 = vunpack.c.h.b16 %v533
    %v859 = vunpack.c.l.b16 %v534
    %v860 = vunpack.c.h.b16 %v534
    %v861 = vunpack.c.l.b16 %v535
    %v862 = vunpack.c.h.b16 %v535
    %v863 = vunpack.c.l.b16 %v536
    %v864 = vunpack.c.h.b16 %v536
    %v865 = vunpack.c.l.b16 %v537
    %v866 = vunpack.c.h.b16 %v537
    %v867 = vunpack.c.l.b16 %v538
    %v868 = vunpack.c.h.b16 %v538
    %v869 = vunpack.c.l.b16 %v539
    %v870 = vunpack.c.h.b16 %v539
    %v871 = vunpack.c.l.b16 %v540
    %v872 = vunpack.c.h.b16 %v540
    %v873 = vunpack.c.l.b16 %v541
    %v874 = vunpack.c.h.b16 %v541
    %v875 = vunpack.c.l.b16 %v542
    %v876 = vunpack.c.h.b16 %v542
    %v877 = vunpack.c.l.b16 %v543
    %v878 = vunpack.c.h.b16 %v543
    %v879 = vunpack.c.l.b16 %v544
    %v880 = vunpack.c.h.b16 %v544
    %v881 = vunpack.c.l.b16 %v545
    %v882 = vunpack.c.h.b16 %v545
    %v883 = vunpack.c.l.b16 %v546
    %v884 = vunpack.c.h.b16 %v546
    %v885 = vunpack.c.l.b16 %v547
    %v886 = vunpack.c.h.b16 %v547
    %v887 = vunpack.c.l.b16 %v548
    %v888 = vunpack.c.h.b16 %v548
    %v889 = vunpack.c.l.b16 %v549
    %v890 = vunpack.c.h.b16 %v549
    %v891 = vunpack.c.l.b16 %v550
    %v892 = vunpack.c.h.b16 %v550
    %v893 = vunpack.c.l.b16 %v551
    %v894 = vunpack.c.h.b16 %v551
    %v895 = vunpack.c.l.b16 %v552
    %v896 = vunpack.c.h.b16 %v552
    %v897 = vunpack.c.l.b16 %v553
    %v898 = vunpack.c.h.b16 %v553
    %v899 = vunpack.c.l.b16 %v554
    %v900 = vunpack.c.h.b16 %v554
    %v901 = vunpack.c.l.b16 %v555
    %v902 = vunpack.c.h.b16 %v555
    %v903 = vunpack.c.l.b16 %v556
    %v904 = vunpack.c.h.b16 %v556
    %v905 = vunpack.c.l.b16 %v557
    %v906 = vunpack.c.h.b16 %v557
    %v907 = vunpack.c.l.b16 %v558
    %v908 = vunpack.c.h.b16 %v558
    %v909 = vunpack.c.l.b16 %v559
    %v910 = vunpack.c.h.b16 %v559
    %v911 = vunpack.c.l.b16 %v560
    %v912 = vunpack.c.h.b16 %v560
    %v913 = vunpack.c.l.b16 %v561
    %v914 = vunpack.c.h.b16 %v561
    %v915 = vunpack.c.l.b16 %v562
    %v916 = vunpack.c.h.b16 %v562
    %v917 = vunpack.c.l.b16 %v563
    %v918 = vunpack.c.h.b16 %v563
    %v919 = vunpack.c.l.b16 %v564
    %v920 = vunpack.c.h.b16 %v564
    %v921 = vunpack.c.l.b16 %v565
    %v922 = vunpack.c.h.b16 %v565
    %v923 = vunpack.c.l.b16 %v566
    %v924 = vunpack.c.h.b16 %v566
    %v925 = vunpack.c.l.b16 %v567
    %v926 = vunpack.c.h.b16 %v567
    %v927 = vunpack.c.l.b16 %v568
    %v928 = vunpack.c.h.b16 %v568
    %v929 = vunpack.c.l.b16 %v569
    %v930 = vunpack.c.h.b16 %v569
    %v931 = vunpack.c.l.b16 %v570
    %v932 = vunpack.c.h.b16 %v570
    %v933 = vunpack.c.l.b16 %v571
    %v934 = vunpack.c.h.b16 %v571
    %v935 = vunpack.c.l.b16 %v572
    %v936 = vunpack.c.h.b16 %v572
    %v937 = vunpack.c.l.b16 %v573
    %v938 = vunpack.c.h.b16 %v573
    %v939 = vunpack.c.l.b16 %v574
    %v940 = vunpack.c.h.b16 %v574
    %v941 = vunpack.c.l.b16 %v575
    %v942 = vunpack.c.h.b16 %v575
    %v943 = vunpack.c.l.b16 %v576
    %v944 = vunpack.c.h.b16 %v576
    %v945 = vunpack.c.l.b16 %v577
    %v946 = vunpack.c.h.b16 %v577
    %v947 = vunpack.c.l.b16 %v578
    %v948 = vunpack.c.h.b16 %v578
    %v949 = vunpack.c.l.b16 %v579
    %v950 = vunpack.c.h.b16 %v579
    %v951 = vunpack.c.l.b16 %v580
    %v952 = vunpack.c.h.b16 %v580
    %v953 = vunpack.c.l.b16 %v581
    %v954 = vunpack.c.h.b16 %v581
    %v955 = vunpack.c.l.b16 %v582
    %v956 = vunpack.c.h.b16 %v582
    %v957 = vunpack.c.l.b16 %v583
    %v958 = vunpack.c.h.b16 %v583
    %v959 = vunpack.c.l.b16 %v584
    %v960 = vunpack.c.h.b16 %v584
    %v961 = vunpack.c.l.b16 %v585
    %v962 = vunpack.c.h.b16 %v585
    %v963 = vunpack.c.l.b16 %v586
    %v964 = vunpack.c.h.b16 %v586
    %v965 = vunpack.c.l.b16 %v587
    %v966 = vunpack.c.h.b16 %v587
    %v967 = vunpack.c.l.b16 %v588
    %v968 = vunpack.c.h.b16 %v588
    %v969 = vunpack.c.l.b16 %v589
    %v970 = vunpack.c.h.b16 %v589
    %v971 = vunpack.c.l.b16 %v590
    %v972 = vunpack.c.h.b16 %v590
    %v973 = vunpack.c.l.b16 %v591
    %v974 = vunpack.c.h.b16 %v591
    %v975 = vunpack.c.l.b16 %v592
    %v976 = vunpack.c.h.b16 %v592
    %v977 = vunpack.c.l.b16 %v593
    %v978 = vunpack.c.h.b16 %v593
    %v979 = vunpack.c.l.b16 %v594
    %v980 = vunpack.c.h.b16 %v594
    %v981 = vunpack.c.l.b16 %v595
    %v982 = vunpack.c.h.b16 %v595
    %v983 = vunpack.c.l.b16 %v596
    %v984 = vunpack.c.h.b16 %v596
    %v985 = vunpack.c.l.b16 %v597
    %v986 = vunpack.c.h.b16 %v597
    %v987 = vunpack.c.l.b16 %v598
    %v988 = vunpack.c.h.b16 %v598
    %v989 = vunpack.c.l.b16 %v599
    %v990 = vunpack.c.h.b16 %v599
    %v991 = vunpack.c.l.b16 %v600
    %v992 = vunpack.c.h.b16 %v600
    %v993 = vunpack.c.l.b16 %v601
    %v994 = vunpack.c.h.b16 %v601
    %v995 = vunpack.c.l.b16 %v602
    %v996 = vunpack.c.h.b16 %v602
    %v997 = vunpack.c.l.b16 %v603
    %v998 = vunpack.c.h.b16 %v603
    %v999 = vunpack.c.l.b16 %v604
    %v1000 = vunpack.c.h.b16 %v604
    %v1001 = vunpack.c.l.b16 %v605
    %v1002 = vunpack.c.h.b16 %v605
    %v1003 = vunpack.c.l.b16 %v606
    %v1004 = vunpack.c.h.b16 %v606
    %v1005 = vunpack.c.l.b16 %v607
    %v1006 = vunpack.c.h.b16 %v607
    %v1007 = vunpack.c.l.b16 %v608
    %v1008 = vunpack.c.h.b16 %v608
    %v1009 = vunpack.c.l.b16 %v609
    %v1010 = vunpack.c.h.b16 %v609
    %v1011 = vunpack.c.l.b16 %v610
    %v1012 = vunpack.c.h.b16 %v610
    %v1013 = vunpack.c.l.b16 %v611
    %v1014 = vunpack.c.h.b16 %v611
    %v1015 = vunpack.c.l.b16 %v612
    %v1016 = vunpack.c.h.b16 %v612
    %v1017 = vunpack.c.l.b16 %v613
    %v1018 = vunpack.c.h.b16 %v613
    %v1019 = vunpack.c.l.b16 %v614
    %v1020 = vunpack.c.h.b16 %v614
    %v1021 = vpack.c.b16 %v769, %v765
    %v1022 = vpack.c.b16 %v770, %v766
    %v1023 = vpack.c.b16 %v771, %v767
    %v1024 = vpack.c.b16 %v772, %v768
    %v1025 = vpack.c.b16 %v777, %v773
    %v1026 = vpack.c.b16 %v778, %v774
    %v1027 = vpack.c.b16 %v779, %v775
    %v1028 = vpack.c.b16 %v780, %v776
    %v1029 = vpack.c.b16 %v785, %v781
    %v1030 = vpack.c.b16 %v786, %v782
    %v1031 = vpack.c.b16 %v787, %v783
    %v1032 = vpack.c.b16 %v788, %v784
    %v1033 = vpack.c.b16 %v793, %v789
    %v1034 = vpack.c.b16 %v794, %v790
    %v1035 = vpack.c.b16 %v795, %v791
    %v1036 = vpack.c.b16 %v796, %v792
    %v1037 = vpack.c.b16 %v801, %v797
    %v1038 = vpack.c.b16 %v802, %v798
    %v1039 = vpack.c.b16 %v803, %v799
    %v1040 = vpack.c.b16 %v804, %v800
    %v1041 = vpack.c.b16 %v809, %v805
    %v1042 = vpack.c.b16 %v810, %v806
    %v1043 = vpack.c.b16 %v811, %v807
    %v1044 = vpack.c.b16 %v812, %v808
    %v1045 = vpack.c.b16 %v817, %v813
    %v1046 = vpack.c.b16 %v818, %v814
    %v1047 = vpack.c.b16 %v819, %v815
    %v1048 = vpack.c.b16 %v820, %v816
    %v1049 = vpack.c.b16 %v825, %v821
    %v1050 = vpack.c.b16 %v826, %v822
    %v1051 = vpack.c.b16 %v827, %v823
    %v1052 = vpack.c.b16 %v828, %v824
    %v1053 = vpack.c.b16 %v833, %v829
    %v1054 = vpack.c.b16 %v834, %v830
    %v1055 = vpack.c.b16 %v835, %v831
    %v1056 = vpack.c.b16 %v836, %v832
    %v1057 = vpack.c.b16 %v841, %v837
    %v1058 = vpack.c.b16 %v842, %v838
    %v1059 = vpack.c.b16 %v843, %v839
    %v1060 = vpack.c.b16 %v844, %v840
    %v1061 = vpack.c.b16 %v849, %v845
    %v1062 = vpack.c.b16 %v850, %v846
    %v1063 = vpack.c.b16 %v851, %v847
    %v1064 = vpack.c.b16 %v852, %v848
    %v1065 = vpack.c.b16 %v857, %v853
    %v1066 = vpack.c.b16 %v858, %v854
    %v1067 = vpack.c.b16 %v859, %v855
    %v1068 = vpack.c.b16 %v860, %v856
    %v1069 = vpack.c.b16 %v865, %v861
    %v1070 = vpack.c.b16 %v866, %v862
    %v1071 = vpack.c.b16 %v867, %v863
    %v1072 = vpack.c.b16 %v868, %v864
    %v1073 = vpack.c.b16 %v873, %v869
    %v1074 = vpack.c.b16 %v874, %v870
    %v1075 = vpack.c.b16 %v875, %v871
    %v1076 = vpack.c.b16 %v876, %v872
    %v1077 = vpack.c.b16 %v881, %v877
    %v1078 = vpack.c.b16 %v882, %v878
    %v1079 = vpack.c.b16 %v883, %v879
    %v1080 = vpack.c.b16 %v884, %v880
    %v1081 = vpack.c.b16 %v889, %v885
    %v1082 = vpack.c.b16 %v890, %v886
    %v1083 = vpack.c.b16 %v891, %v887
    %v1084 = vpack.c.b16 %v892, %v888
    %v1085 = vpack.c.b16 %v897, %v893
    %v1086 = vpack.c.b16 %v898, %v894
    %v1087 = vpack.c.b16 %v899, %v895
    %v1088 = vpack.c.b16 %v900, %v896
    %v1089 = vpack.c.b16 %v905, %v901
    %v1090 = vpack.c.b16 %v906, %v902
    %v1091 = vpack.c.b16 %v907, %v903
    %v1092 = vpack.c.b16 %v908, %v904
    %v1093 = vpack.c.b16 %v913, %v909
    %v1094 = vpack.c.b16 %v914, %v910
    %v1095 = vpack.c.b16 %v915, %v911
    %v1096 = vpack.c.b16 %v916, %v912
    %v1097 = vpack.c.b16 %v921, %v917
    %v1098 = vpack.c.b16 %v922, %v918
    %v1099 = vpack.c.b16 %v923, %v919
    %v1100 = vpack.c.b16 %v924, %v920
    %v1101 = vpack.c.b16 %v929, %v925
    %v1102 = vpack.c.b16 %v930, %v926
    %v1103 = vpack.c.b16 %v931, %v927
    %v1104 = vpack.c.b16 %v932, %v928
    %v1105 = vpack.c.b16 %v937, %v933
    %v1106 = vpack.c.b16 %v938, %v934
    %v1107 = vpack.c.b16 %v939, %v935
    %v1108 = vpack.c.b16 %v940, %v936
    %v1109 = vpack.c.b16 %v945, %v941
    %v1110 = vpack.c.b16 %v946, %v942
    %v1111 = vpack.c.b16 %v947, %v943
    %v1112 = vpack.c.b16 %v948, %v944
    %v1113 = vpack.c.b16 %v953, %v949
    %v1114 = vpack.c.b16 %v954, %v950
    %v1115 = vpack.c.b16 %v955, %v951
    %v1116 = vpack.c.b16 %v956, %v952
    %v1117 = vpack.c.b16 %v961, %v957
    %v1118 = vpack.c.b16 %v962, %v958
    %v1119 = vpack.c.b16 %v963, %v959
    %v1120 = vpack.c.b16 %v964, %v960
    %v1121 = vpack.c.b16 %v969, %v965
    %v1122 = vpack.c.b16 %v970, %v966
    %v1123 = vpack.c.b16 %v971, %v967
    %v1124 = vpack.c.b16 %v972, %v968
    %v1125 = vpack.c.b16 %v977, %v973
    %v1126 = vpack.c.b16 %v978, %v974
    %v1127 = vpack.c.b16 %v979, %v975
    %v1128 = vpack.c.b16 %v980, %v976
    %v1129 = vpack.c.b16 %v985, %v981
    %v1130 = vpack.c.b16 %v986, %v982
    %v1131 = vpack.c.b16 %v987, %v983
    %v1132 = vpack.c.b16 %v988, %v984
    %v1133 = vpack.c.b16 %v993, %v989
    %v1134 = vpack.c.b16 %v994, %v990
    %v1135 = vpack.c.b16 %v995, %v991
    %v1136 = vpack.c.b16 %v996, %v992
    %v1137 = vpack.c.b16 %v1001, %v997
    %v1138 = vpack.c.b16 %v1002, %v998
    %v1139 = vpack.c.b16 %v1003, %v999
    %v1140 = vpack.c.b16 %v1004, %v1000
    %v1141 = vpack.c.b16 %v1009, %v1005
    %v1142 = vpack.c.b16 %v1010, %v1006
    %v1143 = vpack.c.b16 %v1011, %v1007
    %v1144 = vpack.c.b16 %v1012, %v1008
    %v1145 = vpack.c.b16 %v1017, %v1013
    %v1146 = vpack.c.b16 %v1018, %v1014
    %v1147 = vpack.c.b16 %v1019, %v1015
    %v1148 = vpack.c.b16 %v1020, %v1016
    %1277 = vmatprep.subr.bf16.mxu0 %v1050
    %1278 = vmatpush1.bf16.msra.mxu0 %v1049
    %1279 = vmatprep.subr.bf16.mxu0 %v1046
    %1280 = vmatpush1.bf16.msra.mxu0 %v1045
    %1281 = vmatprep.subr.bf16.mxu0 %v1042
    %1282 = vmatpush1.bf16.msra.mxu0 %v1041
    %1283 = vmatprep.subr.bf16.mxu0 %v1038
    %1284 = vmatpush1.bf16.msra.mxu0 %v1037
    %1285 = vmatprep.subr.bf16.mxu0 %v1034
    %1286 = vmatpush1.bf16.msra.mxu0 %v1033
    %1287 = vmatprep.subr.bf16.mxu0 %v1030
    %1288 = vmatpush1.bf16.msra.mxu0 %v1029
    %1289 = vmatprep.subr.bf16.mxu0 %v1026
    %1290 = vmatpush1.bf16.msra.mxu0 %v1025
    %1291 = vmatprep.subr.bf16.mxu0 %v1022
    %1292 = vmatpush1.bf16.msra.mxu0 %v1021
    %1293 = vmatprep.subr.bf16.mxu0 %v1082
    %1294 = vmatpush2.bf16.msra.mxu0 %v1081
    %1295 = vmatprep.subr.bf16.mxu0 %v1078
    %1296 = vmatpush2.bf16.msra.mxu0 %v1077
    %1297 = vmatprep.subr.bf16.mxu0 %v1074
    %1298 = vmatpush2.bf16.msra.mxu0 %v1073
    %1299 = vmatprep.subr.bf16.mxu0 %v1070
    %1300 = vmatpush2.bf16.msra.mxu0 %v1069
    %1301 = vmatprep.subr.bf16.mxu0 %v1066
    %1302 = vmatpush2.bf16.msra.mxu0 %v1065
    %1303 = vmatprep.subr.bf16.mxu0 %v1062
    %1304 = vmatpush2.bf16.msra.mxu0 %v1061
    %1305 = vmatprep.subr.bf16.mxu0 %v1058
    %1306 = vmatpush2.bf16.msra.mxu0 %v1057
    %1307 = vmatprep.subr.bf16.mxu0 %v1054
    %1308 = vmatpush2.bf16.msra.mxu0 %v1053
    %1309 = vmatprep.mubr.bf16.mxu0 %v484
    %1310 = vmatmul.mubr.bf16.gmra.mxu0 %v483
    %v1311 = vpop.f32.mrf.mxu0
    %v1312 = vadd.f32 %v620, %v1311
    %v1313 = vpop.f32.mrf.mxu0
    %v1314 = vadd.f32 %v624, %v1313
    %v1315 = vpop.f32.mrf.mxu0
    %v1316 = vpop.f32.mrf.mxu0
    %1317 = vdwg.mxu0
    %1318 = vmatprep.subr.bf16.mxu0 %v1114
    %1319 = vmatpush1.bf16.msra.mxu0 %v1113
    %1320 = vmatprep.subr.bf16.mxu0 %v1110
    %1321 = vmatpush1.bf16.msra.mxu0 %v1109
    %1322 = vmatprep.subr.bf16.mxu0 %v1106
    %1323 = vmatpush1.bf16.msra.mxu0 %v1105
    %1324 = vmatprep.subr.bf16.mxu0 %v1102
    %1325 = vmatpush1.bf16.msra.mxu0 %v1101
    %1326 = vmatprep.subr.bf16.mxu0 %v1098
    %1327 = vmatpush1.bf16.msra.mxu0 %v1097
    %1328 = vmatprep.subr.bf16.mxu0 %v1094
    %1329 = vmatpush1.bf16.msra.mxu0 %v1093
    %1330 = vmatprep.subr.bf16.mxu0 %v1090
    %1331 = vmatpush1.bf16.msra.mxu0 %v1089
    %1332 = vmatprep.subr.bf16.mxu0 %v1086
    %1333 = vmatpush1.bf16.msra.mxu0 %v1085
    %1334 = vmatprep.subr.bf16.mxu0 %v1146
    %1335 = vmatpush2.bf16.msra.mxu0 %v1145
    %1336 = vmatprep.subr.bf16.mxu0 %v1142
    %1337 = vmatpush2.bf16.msra.mxu0 %v1141
    %1338 = vmatprep.subr.bf16.mxu0 %v1138
    %1339 = vmatpush2.bf16.msra.mxu0 %v1137
    %1340 = vmatprep.subr.bf16.mxu0 %v1134
    %1341 = vmatpush2.bf16.msra.mxu0 %v1133
    %1342 = vmatprep.subr.bf16.mxu0 %v1130
    %1343 = vmatpush2.bf16.msra.mxu0 %v1129
    %1344 = vmatprep.subr.bf16.mxu0 %v1126
    %1345 = vmatpush2.bf16.msra.mxu0 %v1125
    %1346 = vmatprep.subr.bf16.mxu0 %v1122
    %1347 = vmatpush2.bf16.msra.mxu0 %v1121
    %1348 = vmatprep.subr.bf16.mxu0 %v1118
    %1349 = vmatpush2.bf16.msra.mxu0 %v1117
    %1350 = vmatprep.mubr.bf16.mxu0 %v486
    %1351 = vmatmul.mubr.bf16.gmra.mxu0 %v485
    %v1352 = vpop.f32.mrf.mxu0
    %v1353 = vadd.f32 %v1312, %v1352
    %v1354 = vpop.f32.mrf.mxu0
    %v1355 = vadd.f32 %v1314, %v1354
    %v1356 = vpop.f32.mrf.mxu0
    %v1357 = vpop.f32.mrf.mxu0
    %1358 = vdwg.mxu0
    %1359 = vmatprep.subr.bf16.mxu0 %v1052
    %1360 = vmatpush1.bf16.msra.mxu0 %v1051
    %1361 = vmatprep.subr.bf16.mxu0 %v1048
    %1362 = vmatpush1.bf16.msra.mxu0 %v1047
    %1363 = vmatprep.subr.bf16.mxu0 %v1044
    %1364 = vmatpush1.bf16.msra.mxu0 %v1043
    %1365 = vmatprep.subr.bf16.mxu0 %v1040
    %1366 = vmatpush1.bf16.msra.mxu0 %v1039
    %1367 = vmatprep.subr.bf16.mxu0 %v1036
    %1368 = vmatpush1.bf16.msra.mxu0 %v1035
    %1369 = vmatprep.subr.bf16.mxu0 %v1032
    %1370 = vmatpush1.bf16.msra.mxu0 %v1031
    %1371 = vmatprep.subr.bf16.mxu0 %v1028
    %1372 = vmatpush1.bf16.msra.mxu0 %v1027
    %1373 = vmatprep.subr.bf16.mxu0 %v1024
    %1374 = vmatpush1.bf16.msra.mxu0 %v1023
    %1375 = vmatprep.subr.bf16.mxu0 %v1084
    %1376 = vmatpush2.bf16.msra.mxu0 %v1083
    %1377 = vmatprep.subr.bf16.mxu0 %v1080
    %1378 = vmatpush2.bf16.msra.mxu0 %v1079
    %1379 = vmatprep.subr.bf16.mxu0 %v1076
    %1380 = vmatpush2.bf16.msra.mxu0 %v1075
    %1381 = vmatprep.subr.bf16.mxu0 %v1072
    %1382 = vmatpush2.bf16.msra.mxu0 %v1071
    %1383 = vmatprep.subr.bf16.mxu0 %v1068
    %1384 = vmatpush2.bf16.msra.mxu0 %v1067
    %1385 = vmatprep.subr.bf16.mxu0 %v1064
    %1386 = vmatpush2.bf16.msra.mxu0 %v1063
    %1387 = vmatprep.subr.bf16.mxu0 %v1060
    %1388 = vmatpush2.bf16.msra.mxu0 %v1059
    %1389 = vmatprep.subr.bf16.mxu0 %v1056
    %1390 = vmatpush2.bf16.msra.mxu0 %v1055
    %1391 = vmatprep.mubr.bf16.mxu0 %v484
    %1392 = vmatmul.mubr.bf16.gmra.mxu0 %v483
    %v1393 = vpop.f32.mrf.mxu0
    %v1394 = vadd.f32 %v628, %v1393
    %v1395 = vpop.f32.mrf.mxu0
    %v1396 = vadd.f32 %v632, %v1395
    %v1397 = vpop.f32.mrf.mxu0
    %v1398 = vpop.f32.mrf.mxu0
    %1399 = vdwg.mxu0
    %1400 = vmatprep.subr.bf16.mxu0 %v1116
    %1401 = vmatpush1.bf16.msra.mxu0 %v1115
    %1402 = vmatprep.subr.bf16.mxu0 %v1112
    %1403 = vmatpush1.bf16.msra.mxu0 %v1111
    %1404 = vmatprep.subr.bf16.mxu0 %v1108
    %1405 = vmatpush1.bf16.msra.mxu0 %v1107
    %1406 = vmatprep.subr.bf16.mxu0 %v1104
    %1407 = vmatpush1.bf16.msra.mxu0 %v1103
    %1408 = vmatprep.subr.bf16.mxu0 %v1100
    %1409 = vmatpush1.bf16.msra.mxu0 %v1099
    %1410 = vmatprep.subr.bf16.mxu0 %v1096
    %1411 = vmatpush1.bf16.msra.mxu0 %v1095
    %1412 = vmatprep.subr.bf16.mxu0 %v1092
    %1413 = vmatpush1.bf16.msra.mxu0 %v1091
    %1414 = vmatprep.subr.bf16.mxu0 %v1088
    %1415 = vmatpush1.bf16.msra.mxu0 %v1087
    %1416 = vmatprep.subr.bf16.mxu0 %v1148
    %1417 = vmatpush2.bf16.msra.mxu0 %v1147
    %1418 = vmatprep.subr.bf16.mxu0 %v1144
    %1419 = vmatpush2.bf16.msra.mxu0 %v1143
    %1420 = vmatprep.subr.bf16.mxu0 %v1140
    %1421 = vmatpush2.bf16.msra.mxu0 %v1139
    %1422 = vmatprep.subr.bf16.mxu0 %v1136
    %1423 = vmatpush2.bf16.msra.mxu0 %v1135
    %1424 = vmatprep.subr.bf16.mxu0 %v1132
    %1425 = vmatpush2.bf16.msra.mxu0 %v1131
    %1426 = vmatprep.subr.bf16.mxu0 %v1128
    %1427 = vmatpush2.bf16.msra.mxu0 %v1127
    %1428 = vmatprep.subr.bf16.mxu0 %v1124
    %1429 = vmatpush2.bf16.msra.mxu0 %v1123
    %1430 = vmatprep.subr.bf16.mxu0 %v1120
    %1431 = vmatpush2.bf16.msra.mxu0 %v1119
    %1432 = vmatprep.mubr.bf16.mxu0 %v486
    %1433 = vmatmul.mubr.bf16.gmra.mxu0 %v485
    %v1434 = vpop.f32.mrf.mxu0
    %v1435 = vadd.f32 %v1394, %v1434
    %v1436 = vpop.f32.mrf.mxu0
    %v1437 = vadd.f32 %v1396, %v1436
    %v1438 = vpop.f32.mrf.mxu0
    %v1439 = vpop.f32.mrf.mxu0
    %1440 = vdwg.mxu0
    %v1441 = vmax.f32 %v1353, 0.0
    %v1442 = vmax.f32 %v1355, 0.0
    %v1443 = vmax.f32 %v1435, 0.0
    %v1444 = vmax.f32 %v1437, 0.0
    %v1445 = vpack.c.bf16 %v1441, %v1441
    %v1446 = vpack.c.bf16 %v1442, %v1442
    %v1447 = vpack.c.bf16 %v1443, %v1443
    %v1448 = vpack.c.bf16 %v1444, %v1444
    %v1449 = vld [vmem:[#allocation10] sm:$0xf]
    %v1450 = vld [vmem:[#allocation10 + $0x4] sm:$0xf]
    %v1451 = vld [vmem:[#allocation10 + $0x8] sm:$0xf]
    %v1452 = vld [vmem:[#allocation10 + $0xc] sm:$0xf]
    %v1453 = vld [vmem:[#allocation10 + $0x10] sm:$0xf]
    %v1454 = vld [vmem:[#allocation10 + $0x14] sm:$0xf]
    %v1455 = vld [vmem:[#allocation10 + $0x18] sm:$0xf]
    %v1456 = vld [vmem:[#allocation10 + $0x1c] sm:$0xf]
    %v1457 = vld [vmem:[#allocation10 + $0x20] sm:$0xf]
    %v1458 = vld [vmem:[#allocation10 + $0x24] sm:$0xf]
    %v1459 = vld [vmem:[#allocation10 + $0x28] sm:$0xf]
    %v1460 = vld [vmem:[#allocation10 + $0x2c] sm:$0xf]
    %v1461 = vld [vmem:[#allocation10 + $0x30] sm:$0xf]
    %v1462 = vld [vmem:[#allocation10 + $0x34] sm:$0xf]
    %v1463 = vld [vmem:[#allocation10 + $0x38] sm:$0xf]
    %v1464 = vld [vmem:[#allocation10 + $0x3c] sm:$0xf]
    %v1465 = vld [vmem:[#allocation10 + $0x40] sm:$0xf]
    %v1466 = vld [vmem:[#allocation10 + $0x44] sm:$0xf]
    %v1467 = vld [vmem:[#allocation10 + $0x48] sm:$0xf]
    %v1468 = vld [vmem:[#allocation10 + $0x4c] sm:$0xf]
    %v1469 = vld [vmem:[#allocation10 + $0x50] sm:$0xf]
    %v1470 = vld [vmem:[#allocation10 + $0x54] sm:$0xf]
    %v1471 = vld [vmem:[#allocation10 + $0x58] sm:$0xf]
    %v1472 = vld [vmem:[#allocation10 + $0x5c] sm:$0xf]
    %v1473 = vld [vmem:[#allocation10 + $0x60] sm:$0xf]
    %v1474 = vld [vmem:[#allocation10 + $0x64] sm:$0xf]
    %v1475 = vld [vmem:[#allocation10 + $0x68] sm:$0xf]
    %v1476 = vld [vmem:[#allocation10 + $0x6c] sm:$0xf]
    %v1477 = vld [vmem:[#allocation10 + $0x70] sm:$0xf]
    %v1478 = vld [vmem:[#allocation10 + $0x74] sm:$0xf]
    %v1479 = vld [vmem:[#allocation10 + $0x78] sm:$0xf]
    %v1480 = vld [vmem:[#allocation10 + $0x7c] sm:$0xf]
    %v1481 = vld [vmem:[#allocation10 + $0x80] sm:$0xf]
    %v1482 = vld [vmem:[#allocation10 + $0x84] sm:$0xf]
    %v1483 = vld [vmem:[#allocation10 + $0x88] sm:$0xf]
    %v1484 = vld [vmem:[#allocation10 + $0x8c] sm:$0xf]
    %v1485 = vld [vmem:[#allocation10 + $0x90] sm:$0xf]
    %v1486 = vld [vmem:[#allocation10 + $0x94] sm:$0xf]
    %v1487 = vld [vmem:[#allocation10 + $0x98] sm:$0xf]
    %v1488 = vld [vmem:[#allocation10 + $0x9c] sm:$0xf]
    %v1489 = vld [vmem:[#allocation10 + $0xa0] sm:$0xf]
    %v1490 = vld [vmem:[#allocation10 + $0xa4] sm:$0xf]
    %v1491 = vld [vmem:[#allocation10 + $0xa8] sm:$0xf]
    %v1492 = vld [vmem:[#allocation10 + $0xac] sm:$0xf]
    %v1493 = vld [vmem:[#allocation10 + $0xb0] sm:$0xf]
    %v1494 = vld [vmem:[#allocation10 + $0xb4] sm:$0xf]
    %v1495 = vld [vmem:[#allocation10 + $0xb8] sm:$0xf]
    %v1496 = vld [vmem:[#allocation10 + $0xbc] sm:$0xf]
    %v1497 = vld [vmem:[#allocation10 + $0xc0] sm:$0xf]
    %v1498 = vld [vmem:[#allocation10 + $0xc4] sm:$0xf]
    %v1499 = vld [vmem:[#allocation10 + $0xc8] sm:$0xf]
    %v1500 = vld [vmem:[#allocation10 + $0xcc] sm:$0xf]
    %v1501 = vld [vmem:[#allocation10 + $0xd0] sm:$0xf]
    %v1502 = vld [vmem:[#allocation10 + $0xd4] sm:$0xf]
    %v1503 = vld [vmem:[#allocation10 + $0xd8] sm:$0xf]
    %v1504 = vld [vmem:[#allocation10 + $0xdc] sm:$0xf]
    %v1505 = vld [vmem:[#allocation10 + $0xe0] sm:$0xf]
    %v1506 = vld [vmem:[#allocation10 + $0xe4] sm:$0xf]
    %v1507 = vld [vmem:[#allocation10 + $0xe8] sm:$0xf]
    %v1508 = vld [vmem:[#allocation10 + $0xec] sm:$0xf]
    %v1509 = vld [vmem:[#allocation10 + $0xf0] sm:$0xf]
    %v1510 = vld [vmem:[#allocation10 + $0xf4] sm:$0xf]
    %v1511 = vld [vmem:[#allocation10 + $0xf8] sm:$0xf]
    %v1512 = vld [vmem:[#allocation10 + $0xfc] sm:$0xf]
    %v1513 = vld [vmem:[%s8] sm:$0x1]
    %v1515 = vlaneseq
    %v1516 = vshrl.u32 %v1515, 7
    %v1517 = vsub.s32 0, %v1516
    %v1518 = vrot.slane %v1513, %v1517
    %v1584 = vunpack.c.l.b16 %v1449
    %v1585 = vunpack.c.l.b16 %v1450
    %v1586 = vunpack.c.l.b16 %v1451
    %v1587 = vunpack.c.l.b16 %v1452
    %v1588 = vunpack.c.l.b16 %v1453
    %v1589 = vunpack.c.l.b16 %v1454
    %v1590 = vunpack.c.l.b16 %v1455
    %v1591 = vunpack.c.l.b16 %v1456
    %v1592 = vunpack.c.l.b16 %v1457
    %v1593 = vunpack.c.l.b16 %v1458
    %v1594 = vunpack.c.l.b16 %v1459
    %v1595 = vunpack.c.l.b16 %v1460
    %v1596 = vunpack.c.l.b16 %v1461
    %v1597 = vunpack.c.l.b16 %v1462
    %v1598 = vunpack.c.l.b16 %v1463
    %v1599 = vunpack.c.l.b16 %v1464
    %v1600 = vunpack.c.l.b16 %v1465
    %v1601 = vunpack.c.l.b16 %v1466
    %v1602 = vunpack.c.l.b16 %v1467
    %v1603 = vunpack.c.l.b16 %v1468
    %v1604 = vunpack.c.l.b16 %v1469
    %v1605 = vunpack.c.l.b16 %v1470
    %v1606 = vunpack.c.l.b16 %v1471
    %v1607 = vunpack.c.l.b16 %v1472
    %v1608 = vunpack.c.l.b16 %v1473
    %v1609 = vunpack.c.l.b16 %v1474
    %v1610 = vunpack.c.l.b16 %v1475
    %v1611 = vunpack.c.l.b16 %v1476
    %v1612 = vunpack.c.l.b16 %v1477
    %v1613 = vunpack.c.l.b16 %v1478
    %v1614 = vunpack.c.l.b16 %v1479
    %v1615 = vunpack.c.l.b16 %v1480
    %v1616 = vunpack.c.l.b16 %v1481
    %v1617 = vunpack.c.l.b16 %v1482
    %v1618 = vunpack.c.l.b16 %v1483
    %v1619 = vunpack.c.l.b16 %v1484
    %v1620 = vunpack.c.l.b16 %v1485
    %v1621 = vunpack.c.l.b16 %v1486
    %v1622 = vunpack.c.l.b16 %v1487
    %v1623 = vunpack.c.l.b16 %v1488
    %v1624 = vunpack.c.l.b16 %v1489
    %v1625 = vunpack.c.l.b16 %v1490
    %v1626 = vunpack.c.l.b16 %v1491
    %v1627 = vunpack.c.l.b16 %v1492
    %v1628 = vunpack.c.l.b16 %v1493
    %v1629 = vunpack.c.l.b16 %v1494
    %v1630 = vunpack.c.l.b16 %v1495
    %v1631 = vunpack.c.l.b16 %v1496
    %v1632 = vunpack.c.l.b16 %v1497
    %v1633 = vunpack.c.l.b16 %v1498
    %v1634 = vunpack.c.l.b16 %v1499
    %v1635 = vunpack.c.l.b16 %v1500
    %v1636 = vunpack.c.l.b16 %v1501
    %v1637 = vunpack.c.l.b16 %v1502
    %v1638 = vunpack.c.l.b16 %v1503
    %v1639 = vunpack.c.l.b16 %v1504
    %v1640 = vunpack.c.l.b16 %v1505
    %v1641 = vunpack.c.l.b16 %v1506
    %v1642 = vunpack.c.l.b16 %v1507
    %v1643 = vunpack.c.l.b16 %v1508
    %v1644 = vunpack.c.l.b16 %v1509
    %v1645 = vunpack.c.l.b16 %v1510
    %v1646 = vunpack.c.l.b16 %v1511
    %v1647 = vunpack.c.l.b16 %v1512
    %v1648 = vpack.c.b16 %v1585, %v1584
    %v1649 = vpack.c.b16 %v1587, %v1586
    %v1650 = vpack.c.b16 %v1589, %v1588
    %v1651 = vpack.c.b16 %v1591, %v1590
    %v1652 = vpack.c.b16 %v1593, %v1592
    %v1653 = vpack.c.b16 %v1595, %v1594
    %v1654 = vpack.c.b16 %v1597, %v1596
    %v1655 = vpack.c.b16 %v1599, %v1598
    %v1656 = vpack.c.b16 %v1601, %v1600
    %v1657 = vpack.c.b16 %v1603, %v1602
    %v1658 = vpack.c.b16 %v1605, %v1604
    %v1659 = vpack.c.b16 %v1607, %v1606
    %v1660 = vpack.c.b16 %v1609, %v1608
    %v1661 = vpack.c.b16 %v1611, %v1610
    %v1662 = vpack.c.b16 %v1613, %v1612
    %v1663 = vpack.c.b16 %v1615, %v1614
    %v1664 = vpack.c.b16 %v1617, %v1616
    %v1665 = vpack.c.b16 %v1619, %v1618
    %v1666 = vpack.c.b16 %v1621, %v1620
    %v1667 = vpack.c.b16 %v1623, %v1622
    %v1668 = vpack.c.b16 %v1625, %v1624
    %v1669 = vpack.c.b16 %v1627, %v1626
    %v1670 = vpack.c.b16 %v1629, %v1628
    %v1671 = vpack.c.b16 %v1631, %v1630
    %v1672 = vpack.c.b16 %v1633, %v1632
    %v1673 = vpack.c.b16 %v1635, %v1634
    %v1674 = vpack.c.b16 %v1637, %v1636
    %v1675 = vpack.c.b16 %v1639, %v1638
    %v1676 = vpack.c.b16 %v1641, %v1640
    %v1677 = vpack.c.b16 %v1643, %v1642
    %v1678 = vpack.c.b16 %v1645, %v1644
    %v1679 = vpack.c.b16 %v1647, %v1646
    %1712 = vmatprep.subr.bf16.mxu0 0
    %1713 = vmatpush1.bf16.msra.mxu0 %v1655
    %1714 = vmatprep.subr.bf16.mxu0 0
    %1715 = vmatpush1.bf16.msra.mxu0 %v1654
    %1716 = vmatprep.subr.bf16.mxu0 0
    %1717 = vmatpush1.bf16.msra.mxu0 %v1653
    %1718 = vmatprep.subr.bf16.mxu0 0
    %1719 = vmatpush1.bf16.msra.mxu0 %v1652
    %1720 = vmatprep.subr.bf16.mxu0 0
    %1721 = vmatpush1.bf16.msra.mxu0 %v1651
    %1722 = vmatprep.subr.bf16.mxu0 0
    %1723 = vmatpush1.bf16.msra.mxu0 %v1650
    %1724 = vmatprep.subr.bf16.mxu0 0
    %1725 = vmatpush1.bf16.msra.mxu0 %v1649
    %1726 = vmatprep.subr.bf16.mxu0 0
    %1727 = vmatpush1.bf16.msra.mxu0 %v1648
    %1728 = vmatprep.subr.bf16.mxu0 0
    %1729 = vmatpush2.bf16.msra.mxu0 %v1663
    %1730 = vmatprep.subr.bf16.mxu0 0
    %1731 = vmatpush2.bf16.msra.mxu0 %v1662
    %1732 = vmatprep.subr.bf16.mxu0 0
    %1733 = vmatpush2.bf16.msra.mxu0 %v1661
    %1734 = vmatprep.subr.bf16.mxu0 0
    %1735 = vmatpush2.bf16.msra.mxu0 %v1660
    %1736 = vmatprep.subr.bf16.mxu0 0
    %1737 = vmatpush2.bf16.msra.mxu0 %v1659
    %1738 = vmatprep.subr.bf16.mxu0 0
    %1739 = vmatpush2.bf16.msra.mxu0 %v1658
    %1740 = vmatprep.subr.bf16.mxu0 0
    %1741 = vmatpush2.bf16.msra.mxu0 %v1657
    %1742 = vmatprep.subr.bf16.mxu0 0
    %1743 = vmatpush2.bf16.msra.mxu0 %v1656
    %1744 = vmatprep.mubr.bf16.mxu0 %v1446
    %1745 = vmatmul.mubr.bf16.gmra.mxu0 %v1445
    %v1746 = vpop.f32.mrf.mxu0
    %v1747 = vadd.f32 %v1518, %v1746
    %v1748 = vpop.f32.mrf.mxu0
    %v1749 = vpop.f32.mrf.mxu0
    %v1750 = vpop.f32.mrf.mxu0
    %1751 = vdwg.mxu0
    %1752 = vmatprep.subr.bf16.mxu0 0
    %1753 = vmatpush1.bf16.msra.mxu0 %v1671
    %1754 = vmatprep.subr.bf16.mxu0 0
    %1755 = vmatpush1.bf16.msra.mxu0 %v1670
    %1756 = vmatprep.subr.bf16.mxu0 0
    %1757 = vmatpush1.bf16.msra.mxu0 %v1669
    %1758 = vmatprep.subr.bf16.mxu0 0
    %1759 = vmatpush1.bf16.msra.mxu0 %v1668
    %1760 = vmatprep.subr.bf16.mxu0 0
    %1761 = vmatpush1.bf16.msra.mxu0 %v1667
    %1762 = vmatprep.subr.bf16.mxu0 0
    %1763 = vmatpush1.bf16.msra.mxu0 %v1666
    %1764 = vmatprep.subr.bf16.mxu0 0
    %1765 = vmatpush1.bf16.msra.mxu0 %v1665
    %1766 = vmatprep.subr.bf16.mxu0 0
    %1767 = vmatpush1.bf16.msra.mxu0 %v1664
    %1768 = vmatprep.subr.bf16.mxu0 0
    %1769 = vmatpush2.bf16.msra.mxu0 %v1679
    %1770 = vmatprep.subr.bf16.mxu0 0
    %1771 = vmatpush2.bf16.msra.mxu0 %v1678
    %1772 = vmatprep.subr.bf16.mxu0 0
    %1773 = vmatpush2.bf16.msra.mxu0 %v1677
    %1774 = vmatprep.subr.bf16.mxu0 0
    %1775 = vmatpush2.bf16.msra.mxu0 %v1676
    %1776 = vmatprep.subr.bf16.mxu0 0
    %1777 = vmatpush2.bf16.msra.mxu0 %v1675
    %1778 = vmatprep.subr.bf16.mxu0 0
    %1779 = vmatpush2.bf16.msra.mxu0 %v1674
    %1780 = vmatprep.subr.bf16.mxu0 0
    %1781 = vmatpush2.bf16.msra.mxu0 %v1673
    %1782 = vmatprep.subr.bf16.mxu0 0
    %1783 = vmatpush2.bf16.msra.mxu0 %v1672
    %1784 = vmatprep.mubr.bf16.mxu0 %v1448
    %1785 = vmatmul.mubr.bf16.gmra.mxu0 %v1447
    %v1786 = vpop.f32.mrf.mxu0
    %v1787 = vadd.f32 %v1747, %v1786
    %v1788 = vpop.f32.mrf.mxu0
    %v1789 = vpop.f32.mrf.mxu0
    %v1790 = vpop.f32.mrf.mxu0
    %1791 = vdwg.mxu0
    %v1792 = vmax.f32 %v1787, 0.0
    %v1793 = vpack.c.bf16 %v1792, %v1792
    %v1794 = vld [vmem:[#allocation11] sm:$0xf]
    %v1795 = vld [vmem:[#allocation11 + $0x4] sm:$0xf]
    %v1796 = vld [vmem:[#allocation11 + $0x8] sm:$0xf]
    %v1797 = vld [vmem:[#allocation11 + $0xc] sm:$0xf]
    %v1798 = vld [vmem:[#allocation11 + $0x10] sm:$0xf]
    %v1799 = vld [vmem:[#allocation11 + $0x14] sm:$0xf]
    %v1800 = vld [vmem:[#allocation11 + $0x18] sm:$0xf]
    %v1801 = vld [vmem:[#allocation11 + $0x1c] sm:$0xf]
    %v1802 = vld [vmem:[#allocation11 + $0x20] sm:$0xf]
    %v1803 = vld [vmem:[#allocation11 + $0x24] sm:$0xf]
    %v1804 = vld [vmem:[#allocation11 + $0x28] sm:$0xf]
    %v1805 = vld [vmem:[#allocation11 + $0x2c] sm:$0xf]
    %v1806 = vld [vmem:[#allocation11 + $0x30] sm:$0xf]
    %v1807 = vld [vmem:[#allocation11 + $0x34] sm:$0xf]
    %v1808 = vld [vmem:[#allocation11 + $0x38] sm:$0xf]
    %v1809 = vld [vmem:[#allocation11 + $0x3c] sm:$0xf]
    %v1810 = vld [vmem:[%s10] sm:$0x1]
    %v1812 = vlaneseq
    %v1813 = vshrl.u32 %v1812, 7
    %v1814 = vsub.s32 0, %v1813
    %v1815 = vrot.slane %v1810, %v1814
    %v1833 = vunpack.c.l.b16 %v1794
    %v1834 = vunpack.c.l.b16 %v1795
    %v1835 = vunpack.c.l.b16 %v1796
    %v1836 = vunpack.c.l.b16 %v1797
    %v1837 = vunpack.c.l.b16 %v1798
    %v1838 = vunpack.c.l.b16 %v1799
    %v1839 = vunpack.c.l.b16 %v1800
    %v1840 = vunpack.c.l.b16 %v1801
    %v1841 = vunpack.c.l.b16 %v1802
    %v1842 = vunpack.c.l.b16 %v1803
    %v1843 = vunpack.c.l.b16 %v1804
    %v1844 = vunpack.c.l.b16 %v1805
    %v1845 = vunpack.c.l.b16 %v1806
    %v1846 = vunpack.c.l.b16 %v1807
    %v1847 = vunpack.c.l.b16 %v1808
    %v1848 = vunpack.c.l.b16 %v1809
    %v1849 = vpack.c.b16 %v1834, %v1833
    %v1850 = vpack.c.b16 %v1836, %v1835
    %v1851 = vpack.c.b16 %v1838, %v1837
    %v1852 = vpack.c.b16 %v1840, %v1839
    %v1853 = vpack.c.b16 %v1842, %v1841
    %v1854 = vpack.c.b16 %v1844, %v1843
    %v1855 = vpack.c.b16 %v1846, %v1845
    %v1856 = vpack.c.b16 %v1848, %v1847
    %1865 = vmatprep.subr.bf16.mxu0 0
    %1866 = vmatpush1.bf16.msra.mxu0 %v1856
    %1867 = vmatprep.subr.bf16.mxu0 0
    %1868 = vmatpush1.bf16.msra.mxu0 %v1855
    %1869 = vmatprep.subr.bf16.mxu0 0
    %1870 = vmatpush1.bf16.msra.mxu0 %v1854
    %1871 = vmatprep.subr.bf16.mxu0 0
    %1872 = vmatpush1.bf16.msra.mxu0 %v1853
    %1873 = vmatprep.subr.bf16.mxu0 0
    %1874 = vmatpush1.bf16.msra.mxu0 %v1852
    %1875 = vmatprep.subr.bf16.mxu0 0
    %1876 = vmatpush1.bf16.msra.mxu0 %v1851
    %1877 = vmatprep.subr.bf16.mxu0 0
    %1878 = vmatpush1.bf16.msra.mxu0 %v1850
    %1879 = vmatprep.subr.bf16.mxu0 0
    %1880 = vmatpush1.bf16.msra.mxu0 %v1849
    %1881 = vmatprep.subr.bf16.mxu0 0
    %1882 = vmatpush2.bf16.msra.mxu0 0
    %1883 = vmatprep.subr.bf16.mxu0 0
    %1884 = vmatpush2.bf16.msra.mxu0 0
    %1885 = vmatprep.subr.bf16.mxu0 0
    %1886 = vmatpush2.bf16.msra.mxu0 0
    %1887 = vmatprep.subr.bf16.mxu0 0
    %1888 = vmatpush2.bf16.msra.mxu0 0
    %1889 = vmatprep.subr.bf16.mxu0 0
    %1890 = vmatpush2.bf16.msra.mxu0 0
    %1891 = vmatprep.subr.bf16.mxu0 0
    %1892 = vmatpush2.bf16.msra.mxu0 0
    %1893 = vmatprep.subr.bf16.mxu0 0
    %1894 = vmatpush2.bf16.msra.mxu0 0
    %1895 = vmatprep.subr.bf16.mxu0 0
    %1896 = vmatpush2.bf16.msra.mxu0 0
    %1897 = vmatprep.mubr.bf16.mxu0 0
    %1898 = vmatmul.mubr.bf16.gmra.mxu0 %v1793
    %v1899 = vpop.f32.mrf.mxu0
    %v1900 = vadd.f32 %v1815, %v1899
    %v1901 = vpop.f32.mrf.mxu0
    %v1902 = vpop.f32.mrf.mxu0
    %v1903 = vpop.f32.mrf.mxu0
    %1904 = vdwg.mxu0
    %1905 = vmax.xlane.f32.xlu0 %v1900
    %v1906 = vpop.xlane.xlu0 %1905
    %v1907 = vsub.f32 %v1900, %v1906
    %v1908 = vmul.f32 %v1907, 1.442695
    %v1909 = vpow.pop %v1908
    %1910 = vadd.xlane.f32.xlu0 %v1909
    %v1911 = vpop.xlane.xlu0 %1910
    %v1912 = vrcp.pop %v1911
    %v1913 = vmul.f32 %v1909, %v1912
    %1914 = vst [vmem:[#allocation13] sm:$0xff] %v1913
    // Predicated region
    $region70: #{tpu_custom_call.1} parent=1 // pred_check
      _
    $region71: #{tpu_custom_call.1} parent=1 // pred_check_branch
      %1916 = sbr.rel (0) target = $region73
    $region72: #{tpu_custom_call.1} parent=1 // pred_region
      %s1918 = ssub.s32 128, 128
      %1919 = vsyncadd [#allocation4], %s1918
      %s1921 = sshll.u32 [#allocation13], 4
      %s1922 = int_to_ptr.vmem [resolvable:$true] %s1921
      %1924 = dma.vmem_to_hbm [thread:$0]  %s1922, 128, %s11, [#allocation4]
    $region73: #{tpu_custom_call.1} parent=1 // pred_fallthru
      _
    // Predicated region
    $region74: #{tpu_custom_call.1} parent=1 // pred_check
      _
    $region75: #{tpu_custom_call.1} parent=1 // pred_check_branch
      %1926 = sbr.rel (0) target = $region77
    $region76: #{tpu_custom_call.1} parent=1 // pred_region
      %1927 = dma.done [#allocation4], 128
    $region77: #{tpu_custom_call.1} parent=1 // pred_fallthru
      _
    %1928 = vsyncpa [#allocation3], 1
    %1929 = vsyncpa [#allocation6], 1
    %1930 = vsyncpa [#allocation9], 1
    %1931 = vsyncpa [#allocation12], 1
    %1932 = vsyncpa [#allocation4], 1

</llo_original>
